<compile_context>
chip_gen: v6e
topology: v6e:2x2x1
jax: 0.10.0
libtpu: 0.0.40
codegen_flags: <defaults>
</compile_context>

<pallas_src>
import numpy as np
import jax
import jax.numpy as jnp
from jax.experimental import pallas as pl
from jax.experimental.pallas import tpu as pltpu

LANE = 128
SUBLANE_BF16 = 16   # bf16 packs 16 sublanes per vreg -> pad G to 16


def _round_up(x, m):
    return (x + m - 1) // m * m


def _pick_row_tile():
    """Per-generation default M tile for the streamed A_hat rows."""
    try:
        kind = jax.devices()[0].device_kind.lower()
    except Exception:
        return 256
    if "v6" in kind:
        return 512        # 128 MiB VMEM + 256-wide MXU -> big tiles amortize step overhead
    if "v5 lite" in kind or "v5e" in kind:
        return 256        # 128x128 MXU; modest tiles suffice
    return 256            # v7x / default: 256-wide MXU but only 64 MiB VMEM


# ------------------------------ fused forward -------------------------------

def gcn_forward(x, a_hat, center_indices, params, *, row_tile=None):
    """Fused GCN forward (eval mode). Returns log-probs of shape [G, C].

    Kernel per row tile:
        H_tile = relu(scale_rows * (A_q[tile] @ XW) + b1)      # layer 1
        acc   += A_c[:, tile] @ H_tile                          # layer 2, center rows only
    Final grid step:
        logits = acc @ W2 + b2 ; out = log_softmax(logits)
    """
    n, f_in = x.shape
    hidden = params["w1"].shape[1]
    num_classes = params["w2"].shape[1]
    g = int(center_indices.shape[0])

    if row_tile is None:
        row_tile = _pick_row_tile()
    row_tile = min(row_tile, _round_up(n, LANE))          # no pointless padding
    n_pad = _round_up(max(n, row_tile), row_tile)
    h_pad = _round_up(hidden, LANE)
    c_pad = _round_up(num_classes, LANE)
    g_pad = _round_up(g, SUBLANE_BF16)

    centers = jnp.asarray(center_indices, dtype=jnp.int32)

    # -------- host/XLA glue (runs once per call) --------
    # Hoisted feature transform X @ W1 (tiny, dense) -> bf16, padded, resident.
    xw = jnp.dot(x, params["w1"], preferred_element_type=jnp.float32)
    xw_p = jnp.zeros((n_pad, h_pad), jnp.bfloat16).at[:n, :hidden].set(
        xw.astype(jnp.bfloat16))

    # Streamed adjacency: per-row int8 quantization (A is the HBM-bound
    # operand; int8 halves its bytes vs bf16). Dequant after the MXU dot.
    row_max = jnp.max(jnp.abs(a_hat), axis=1)
    scale = jnp.where(row_max > 0, row_max / 127.0, 1.0)
    a_q = jnp.clip(jnp.round(a_hat / scale[:, None]), -127, 127).astype(jnp.int8)
    a_q_p = jnp.zeros((n_pad, n_pad), jnp.int8).at[:n, :n].set(a_q)
    a_scale_p = jnp.zeros((n_pad, 1), jnp.float32).at[:n, 0].set(scale)

    # Center rows of A_hat (tiny): bf16, fully VMEM-resident in the kernel.
    a_c_p = jnp.zeros((g_pad, n_pad), jnp.bfloat16).at[:g, :n].set(
        a_hat[centers].astype(jnp.bfloat16))

    b1_p = jnp.zeros((1, h_pad), jnp.float32).at[0, :hidden].set(params["b1"])
    w2_p = jnp.zeros((h_pad, c_pad), jnp.float32).at[:hidden, :num_classes].set(
        params["w2"])
    b2_p = jnp.zeros((1, c_pad), jnp.float32).at[0, :num_classes].set(params["b2"])

    grid = (n_pad // row_tile,)

    def kernel(a_ref, asc_ref, ac_ref, xw_ref, b1_ref, w2_ref, b2_ref,
               o_ref, acc_ref):
        i = pl.program_id(0)

        @pl.when(i == 0)
        def _init():
            acc_ref[...] = jnp.zeros_like(acc_ref)

        # Layer 1 for this row tile (int8 A dequantized per row after the dot).
        h = jnp.dot(a_ref[...].astype(jnp.bfloat16), xw_ref[...],
                    preferred_element_type=jnp.float32)
        h = jnp.maximum(h * asc_ref[...] + b1_ref[...], 0.0)
        # TODO(synk): training-mode dropout not implemented (eval -> identity).

        # Layer 2 restricted to the center rows: acc += A_c[:, tile] @ H_tile.
        col0 = pl.multiple_of(i * row_tile, row_tile)
        acc_ref[...] += jnp.dot(ac_ref[:, pl.ds(col0, row_tile)],
                                h.astype(jnp.bfloat16),
                                preferred_element_type=jnp.float32)

        # Finalize once. NOTE: o_ref is written only here; this is correct
        # only because the output index_map is constant (single write-back).
        # Do not make out_specs depend on i.
        @pl.when(i == pl.num_programs(0) - 1)
        def _finalize():
            logits = jnp.dot(acc_ref[...], w2_ref[...],
                             preferred_element_type=jnp.float32) + b2_ref[...]
            col = jax.lax.broadcasted_iota(jnp.int32, logits.shape, 1)
            logits = jnp.where(col < num_classes, logits, -1e30)
            m = jnp.max(logits, axis=-1, keepdims=True)
            z = logits - m
            lse = jnp.log(jnp.sum(jnp.exp(z), axis=-1, keepdims=True))
            o_ref[...] = z - lse

    # VMEM budget from the actual resident set (streamed A tile double
    # buffered, invariants single buffered), with headroom; capped at 64 MiB
    # so the same limit is valid on v7x as well as v5e/v6e.
    resident = (
        row_tile * n_pad * 1 * 2            # int8 A row tile, 2 buffers
        + row_tile * n_pad * 2              # bf16 dequantized-A temporary
        + row_tile * 4 * 2                  # per-row dequant scale, 2 buffers
        + g_pad * n_pad * 2                 # A_c (bf16), resident
        + n_pad * h_pad * 2                 # XW (bf16), resident
        + h_pad * 4 + h_pad * c_pad * 4 + c_pad * 4   # b1, W2, b2 (f32)
        + g_pad * h_pad * 4                 # accumulator scratch
        + g_pad * c_pad * 4 * 2             # output
        + row_tile * h_pad * 6              # H tile temporaries (f32 + bf16)
    )
    vmem_limit = int(max(16 << 20, min(resident * 3 // 2 + (8 << 20), 64 << 20)))

    def _run(single_buffer_invariants):
        inv_kw = ({"pipeline_mode": pl.Buffered(1)}
                  if single_buffer_invariants else {})
        grid_spec = pltpu.PrefetchScalarGridSpec(
            num_scalar_prefetch=0,
            grid=grid,
            in_specs=[
                pl.BlockSpec((row_tile, n_pad), lambda i: (i, 0)),       # A_q row tile (streamed)
                pl.BlockSpec((row_tile, 1), lambda i: (i, 0)),           # per-row dequant scale
                pl.BlockSpec((g_pad, n_pad), lambda i: (0, 0), **inv_kw),  # A_c (resident)
                pl.BlockSpec((n_pad, h_pad), lambda i: (0, 0), **inv_kw),  # XW (resident)
                pl.BlockSpec((1, h_pad), lambda i: (0, 0), **inv_kw),      # b1
                pl.BlockSpec((h_pad, c_pad), lambda i: (0, 0), **inv_kw),  # W2 (f32)
                pl.BlockSpec((1, c_pad), lambda i: (0, 0), **inv_kw),      # b2
            ],
            out_specs=pl.BlockSpec((g_pad, c_pad), lambda i: (0, 0)),
            scratch_shapes=[
                pltpu.VMEM((g_pad, h_pad), jnp.float32),   # center aggregation acc
            ],
        )
        fn = pl.pallas_call(
            kernel,
            out_shape=jax.ShapeDtypeStruct((g_pad, c_pad), jnp.float32),
            grid_spec=grid_spec,
            compiler_params=pltpu.CompilerParams(
                dimension_semantics=("arbitrary",),   # row tiles feed an accumulator
                vmem_limit_bytes=vmem_limit,
            ),
        )
        return fn(a_q_p, a_scale_p, a_c_p, xw_p, b1_p, w2_p, b2_p)

    try:
        out_p = _run(True)
    except Exception:
        # Fallback for jax builds where BlockSpec pipeline_mode / Buffered(1)
        # is unsupported; identical kernel, default double buffering.
        out_p = _run(False)

    return out_p[:g, :num_classes]


# --------------------------- graph preprocessing ----------------------------

def normalized_adjacency(edge_index, num_nodes):
    """Dense D^{-1/2} (A + I) D^{-1/2}, float32, shape [N, N]."""
    src, dst = edge_index
    a = jnp.zeros((num_nodes, num_nodes), jnp.float32)
    a = a.at[dst, src].add(1.0)                        # row i aggregates from sources j
    a = a + jnp.eye(num_nodes, dtype=jnp.float32)      # self loops
    deg = jnp.sum(a, axis=1)
    dinv = jnp.where(deg > 0, 1.0 / jnp.sqrt(deg), 0.0)
    return dinv[:, None] * a * dinv[None, :]


# ---------------------------- pure-JAX reference ----------------------------

def reference_forward(x, a_hat, center_indices, params):
    h = jnp.maximum(a_hat @ (x @ params["w1"]) + params["b1"], 0.0)
    out = a_hat @ (h @ params["w2"]) + params["b2"]
    out = out[jnp.asarray(center_indices)]
    return jax.nn.log_softmax(out, axis=1)


# --------------------------------- main --------------------------------------

if __name__ == "__main__":
    key = jax.random.PRNGKey(0)

    # Small synthetic "dataset": 4 subgraphs of 8 nodes each.
    num_nodes = 32
    num_node_features = 4
    hidden = 16
    num_classes = 8

    k_x, k_e, k_w1, k_w2 = jax.random.split(key, 4)

    # Node features.
    x = jax.random.normal(k_x, (num_nodes, num_node_features), jnp.float32)

    # Deterministic random edges (directed pairs); self-loops added in norm.
    num_edges = 96
    src = jax.random.randint(k_e, (num_edges,), 0, num_nodes)
    dst = (src + jax.random.randint(jax.random.fold_in(k_e, 1),
                                    (num_edges,), 1, num_nodes)) % num_nodes
    edge_index = jnp.stack([src, dst], axis=0)

    # Batch vector: node -> graph id (host array; center indices are static).
    batch = np.repeat(np.arange(4), 8)
    _, center_indices = np.unique(batch, return_index=True)
    center_indices = np.asarray(center_indices, dtype=np.int32)

    # Deterministic Glorot-uniform-ish parameters (GCNConv shapes).
    def glorot(k, fan_in, fan_out):
        limit = float(np.sqrt(6.0 / (fan_in + fan_out)))
        return jax.random.uniform(k, (fan_in, fan_out), jnp.float32, -limit, limit)

    params = {
        "w1": glorot(k_w1, num_node_features, hidden),
        "b1": jnp.zeros((hidden,), jnp.float32),
        "w2": glorot(k_w2, hidden, num_classes),
        "b2": jnp.zeros((num_classes,), jnp.float32),
    }

    a_hat = normalized_adjacency(edge_index, num_nodes)

    out = gcn_forward(x, a_hat, center_indices, params)
    out = jax.block_until_ready(out)
    out_np = np.asarray(out)

    # Sanity: shape, prob-space normalization, and match vs f32 reference
    # (tolerance accounts for bf16 matmul operands + int8-quantized A_hat).
    assert out_np.shape == (4, num_classes)
    assert np.allclose(np.exp(out_np).sum(axis=1), 1.0, atol=1e-5)
    ref = np.asarray(reference_forward(x, a_hat, center_indices, params))
    assert np.allclose(out_np, ref, atol=5e-2), np.abs(out_np - ref).max()

    print("KERNEL_OK")
</pallas_src>

<mosaic_0001>
module attributes {stable_mosaic.version = 11 : i64} {
  func.func @kernel(%arg0: i32, %arg1: memref<128x128xi8, #tpu.memory_space<vmem>>, %arg2: memref<128x1xf32, #tpu.memory_space<vmem>>, %arg3: memref<16x128xbf16, #tpu.memory_space<vmem>>, %arg4: memref<128x128xbf16, #tpu.memory_space<vmem>>, %arg5: memref<1x128xf32, #tpu.memory_space<vmem>>, %arg6: memref<128x128xf32, #tpu.memory_space<vmem>>, %arg7: memref<1x128xf32, #tpu.memory_space<vmem>>, %arg8: memref<16x128xf32, #tpu.memory_space<vmem>>, %arg9: memref<16x128xf32, #tpu.memory_space<vmem>>) attributes {dimension_semantics = [#tpu.dimension_semantics<arbitrary>], iteration_bounds = array<i64: 1>, scalar_prefetch = 0 : i64, scratch_operands = 1 : i64, tpu.core_type = #tpu.core_type<tc>, window_params = [{transform_indices = @transform_0, window_bounds = array<i64: 128, 128>}, {transform_indices = @transform_1, window_bounds = array<i64: 128, 1>}, {pipeline_mode = #tpu.pipeline_mode<synchronous>, transform_indices = @transform_2, window_bounds = array<i64: 16, 128>}, {pipeline_mode = #tpu.pipeline_mode<synchronous>, transform_indices = @transform_3, window_bounds = array<i64: 128, 128>}, {pipeline_mode = #tpu.pipeline_mode<synchronous>, transform_indices = @transform_4, window_bounds = array<i64: 1, 128>}, {pipeline_mode = #tpu.pipeline_mode<synchronous>, transform_indices = @transform_5, window_bounds = array<i64: 128, 128>}, {pipeline_mode = #tpu.pipeline_mode<synchronous>, transform_indices = @transform_6, window_bounds = array<i64: 1, 128>}, {pipeline_mode = #tpu.pipeline_mode<synchronous>, transform_indices = @transform_7, window_bounds = array<i64: 16, 128>}]} {
    %c0_i32 = arith.constant 0 : i32
    %0 = arith.cmpi eq, %arg0, %c0_i32 : i32
    %1 = arith.extui %0 : i1 to i32
    %c0_i32_0 = arith.constant 0 : i32
    %2 = arith.cmpi ne, %1, %c0_i32_0 : i32
    scf.if %2 {
      %cst_17 = arith.constant 0.000000e+00 : f32
      %27 = vector.broadcast %cst_17 : f32 to vector<16x128xf32>
      %c0_18 = arith.constant 0 : index
      %c0_19 = arith.constant 0 : index
      %28 = vector.load %arg9[%c0_18, %c0_19] : memref<16x128xf32, #tpu.memory_space<vmem>>, vector<16x128xf32>
      tpu.vector_store %arg9[%c0_18, %c0_19], %27 {strides = array<i32>} : memref<16x128xf32, #tpu.memory_space<vmem>>, vector<16x128xf32>,
    } else {
    }
    %c0 = arith.constant 0 : index
    %c0_1 = arith.constant 0 : index
    %3 = vector.load %arg1[%c0, %c0_1] : memref<128x128xi8, #tpu.memory_space<vmem>>, vector<128x128xi8>
    %4 = arith.sitofp %3 : vector<128x128xi8> to vector<128x128xbf16>
    %c0_2 = arith.constant 0 : index
    %c0_3 = arith.constant 0 : index
    %5 = vector.load %arg4[%c0_2, %c0_3] : memref<128x128xbf16, #tpu.memory_space<vmem>>, vector<128x128xbf16>
    %cst = arith.constant dense<0.000000e+00> : vector<128x128xf32>
    %6 = tpu.matmul %4, %5, %cst {dimension_numbers = #tpu.dot_dimension_numbers<[1], [0], [0], [1], [0, 0, 1, 1], [], []>} : vector<128x128xbf16>, vector<128x128xbf16>, vector<128x128xf32> -> vector<128x128xf32>
    %c0_4 = arith.constant 0 : index
    %c0_5 = arith.constant 0 : index
    %7 = vector.load %arg2[%c0_4, %c0_5] : memref<128x1xf32, #tpu.memory_space<vmem>>, vector<128x1xf32>
    %8 = vector.broadcast %7 : vector<128x1xf32> to vector<128x128xf32>
    %9 = arith.mulf %6, %8 : vector<128x128xf32>
    %c0_6 = arith.constant 0 : index
    %c0_7 = arith.constant 0 : index
    %10 = vector.load %arg5[%c0_6, %c0_7] : memref<1x128xf32, #tpu.memory_space<vmem>>, vector<1x128xf32>
    %11 = vector.broadcast %10 : vector<1x128xf32> to vector<128x128xf32>
    %12 = arith.addf %9, %11 : vector<128x128xf32>
    %cst_8 = arith.constant 0.000000e+00 : f32
    %13 = vector.broadcast %cst_8 : f32 to vector<128x128xf32>
    %14 = arith.maximumf %12, %13 : vector<128x128xf32>
    %c128_i32 = arith.constant 128 : i32
    %15 = arith.muli %arg0, %c128_i32 : i32
    %16 = tpu.assume_multiple %15, 128 : i32
    %c0_9 = arith.constant 0 : index
    %c0_10 = arith.constant 0 : index
    %17 = vector.load %arg9[%c0_9, %c0_10] : memref<16x128xf32, #tpu.memory_space<vmem>>, vector<16x128xf32>
    %c0_11 = arith.constant 0 : index
    %18 = arith.index_cast %16 : i32 to index
    %19 = vector.load %arg3[%c0_11, %18] : memref<16x128xbf16, #tpu.memory_space<vmem>>, vector<16x128xbf16>
    %20 = arith.truncf %14 : vector<128x128xf32> to vector<128x128xbf16>
    %cst_12 = arith.constant dense<0.000000e+00> : vector<16x128xf32>
    %21 = tpu.matmul %19, %20, %cst_12 {dimension_numbers = #tpu.dot_dimension_numbers<[1], [0], [0], [1], [0, 0, 1, 1], [], []>} : vector<16x128xbf16>, vector<128x128xbf16>, vector<16x128xf32> -> vector<16x128xf32>
    %22 = arith.addf %17, %21 : vector<16x128xf32>
    %c0_13 = arith.constant 0 : index
    %c0_14 = arith.constant 0 : index
    %23 = vector.load %arg9[%c0_13, %c0_14] : memref<16x128xf32, #tpu.memory_space<vmem>>, vector<16x128xf32>
    tpu.vector_store %arg9[%c0_13, %c0_14], %22 {strides = array<i32>} : memref<16x128xf32, #tpu.memory_space<vmem>>, vector<16x128xf32>,
    %c0_i32_15 = arith.constant 0 : i32
    %24 = arith.cmpi eq, %arg0, %c0_i32_15 : i32
    %25 = arith.extui %24 : i1 to i32
    %c0_i32_16 = arith.constant 0 : i32
    %26 = arith.cmpi ne, %25, %c0_i32_16 : i32
    scf.if %26 {
      %c0_17 = arith.constant 0 : index
      %c0_18 = arith.constant 0 : index
      %27 = vector.load %arg9[%c0_17, %c0_18] : memref<16x128xf32, #tpu.memory_space<vmem>>, vector<16x128xf32>
      %c0_19 = arith.constant 0 : index
      %c0_20 = arith.constant 0 : index
      %28 = vector.load %arg6[%c0_19, %c0_20] : memref<128x128xf32, #tpu.memory_space<vmem>>, vector<128x128xf32>
      %cst_21 = arith.constant dense<0.000000e+00> : vector<16x128xf32>
      %29 = tpu.matmul %27, %28, %cst_21 {dimension_numbers = #tpu.dot_dimension_numbers<[1], [0], [0], [1], [0, 0, 1, 1], [], []>} : vector<16x128xf32>, vector<128x128xf32>, vector<16x128xf32> -> vector<16x128xf32>
      %c0_22 = arith.constant 0 : index
      %c0_23 = arith.constant 0 : index
      %30 = vector.load %arg7[%c0_22, %c0_23] : memref<1x128xf32, #tpu.memory_space<vmem>>, vector<1x128xf32>
      %31 = vector.broadcast %30 : vector<1x128xf32> to vector<16x128xf32>
      %32 = arith.addf %29, %31 : vector<16x128xf32>
      %33 = tpu.iota {dimensions = array<i32: 1>} : vector<16x128xi32>
      %c8_i32 = arith.constant 8 : i32
      %34 = vector.broadcast %c8_i32 : i32 to vector<16x128xi32>
      %35 = arith.cmpi slt, %33, %34 : vector<16x128xi32>
      %cst_24 = arith.constant -1.000000e+30 : f32
      %36 = vector.broadcast %cst_24 : f32 to vector<16x128xf32>
      %37 = arith.select %35, %32, %36 : vector<16x128xi1>, vector<16x128xf32>
      %cst_25 = arith.constant dense<0xFF800000> : vector<16xf32>
      %38 = vector.multi_reduction <maximumf>, %37, %cst_25 [1] : vector<16x128xf32> to vector<16xf32>
      %39 = vector.shape_cast %38 : vector<16xf32> to vector<16x1xf32>
      %40 = vector.broadcast %39 : vector<16x1xf32> to vector<16x128xf32>
      %41 = arith.subf %37, %40 : vector<16x128xf32>
      %42 = math.exp %41 : vector<16x128xf32>
      %cst_26 = arith.constant dense<0.000000e+00> : vector<16xf32>
      %43 = vector.multi_reduction <add>, %42, %cst_26 [1] : vector<16x128xf32> to vector<16xf32>
      %44 = vector.shape_cast %43 : vector<16xf32> to vector<16x1xf32>
      %45 = math.log %44 : vector<16x1xf32>
      %46 = vector.broadcast %45 : vector<16x1xf32> to vector<16x128xf32>
      %47 = arith.subf %41, %46 : vector<16x128xf32>
      %c0_27 = arith.constant 0 : index
      %c0_28 = arith.constant 0 : index
      %48 = vector.load %arg8[%c0_27, %c0_28] : memref<16x128xf32, #tpu.memory_space<vmem>>, vector<16x128xf32>
      tpu.vector_store %arg8[%c0_27, %c0_28], %47 {strides = array<i32>} : memref<16x128xf32, #tpu.memory_space<vmem>>, vector<16x128xf32>,
    } else {
    }
    return
  }
  func.func @transform_0(%arg0: i32) -> (i32, i32) {
    %c0_i32 = arith.constant 0 : i32
    %c0_i32_0 = arith.constant 0 : i32
    return %arg0, %c0_i32 : i32, i32
  }
  func.func @transform_1(%arg0: i32) -> (i32, i32) {
    %c0_i32 = arith.constant 0 : i32
    %c0_i32_0 = arith.constant 0 : i32
    return %arg0, %c0_i32 : i32, i32
  }
  func.func @transform_2(%arg0: i32) -> (i32, i32) {
    %c0_i32 = arith.constant 0 : i32
    %c0_i32_0 = arith.constant 0 : i32
    %c0_i32_1 = arith.constant 0 : i32
    return %c0_i32, %c0_i32_0 : i32, i32
  }
  func.func @transform_3(%arg0: i32) -> (i32, i32) {
    %c0_i32 = arith.constant 0 : i32
    %c0_i32_0 = arith.constant 0 : i32
    %c0_i32_1 = arith.constant 0 : i32
    return %c0_i32, %c0_i32_0 : i32, i32
  }
  func.func @transform_4(%arg0: i32) -> (i32, i32) {
    %c0_i32 = arith.constant 0 : i32
    %c0_i32_0 = arith.constant 0 : i32
    %c0_i32_1 = arith.constant 0 : i32
    return %c0_i32, %c0_i32_0 : i32, i32
  }
  func.func @transform_5(%arg0: i32) -> (i32, i32) {
    %c0_i32 = arith.constant 0 : i32
    %c0_i32_0 = arith.constant 0 : i32
    %c0_i32_1 = arith.constant 0 : i32
    return %c0_i32, %c0_i32_0 : i32, i32
  }
  func.func @transform_6(%arg0: i32) -> (i32, i32) {
    %c0_i32 = arith.constant 0 : i32
    %c0_i32_0 = arith.constant 0 : i32
    %c0_i32_1 = arith.constant 0 : i32
    return %c0_i32, %c0_i32_0 : i32, i32
  }
  func.func @transform_7(%arg0: i32) -> (i32, i32) {
    %c0_i32 = arith.constant 0 : i32
    %c0_i32_0 = arith.constant 0 : i32
    %c0_i32_1 = arith.constant 0 : i32
    return %c0_i32, %c0_i32_0 : i32, i32
  }
}

module attributes {stable_mosaic.version = 11 : i64} {
  func.func @kernel(%arg0: i32, %arg1: memref<128x128xi8, #tpu.memory_space<vmem>>, %arg2: memref<128x1xf32, #tpu.memory_space<vmem>>, %arg3: memref<16x128xbf16, #tpu.memory_space<vmem>>, %arg4: memref<128x128xbf16, #tpu.memory_space<vmem>>, %arg5: memref<1x128xf32, #tpu.memory_space<vmem>>, %arg6: memref<128x128xf32, #tpu.memory_space<vmem>>, %arg7: memref<1x128xf32, #tpu.memory_space<vmem>>, %arg8: memref<16x128xf32, #tpu.memory_space<vmem>>, %arg9: memref<16x128xf32, #tpu.memory_space<vmem>>) attributes {dimension_semantics = [#tpu.dimension_semantics<arbitrary>], iteration_bounds = array<i64: 1>, scalar_prefetch = 0 : i64, scratch_operands = 1 : i64, tpu.core_type = #tpu.core_type<tc>, window_params = [{transform_indices = @transform_0, window_bounds = array<i64: 128, 128>}, {transform_indices = @transform_1, window_bounds = array<i64: 128, 1>}, {pipeline_mode = #tpu.pipeline_mode<synchronous>, transform_indices = @transform_2, window_bounds = array<i64: 16, 128>}, {pipeline_mode = #tpu.pipeline_mode<synchronous>, transform_indices = @transform_3, window_bounds = array<i64: 128, 128>}, {pipeline_mode = #tpu.pipeline_mode<synchronous>, transform_indices = @transform_4, window_bounds = array<i64: 1, 128>}, {pipeline_mode = #tpu.pipeline_mode<synchronous>, transform_indices = @transform_5, window_bounds = array<i64: 128, 128>}, {pipeline_mode = #tpu.pipeline_mode<synchronous>, transform_indices = @transform_6, window_bounds = array<i64: 1, 128>}, {pipeline_mode = #tpu.pipeline_mode<synchronous>, transform_indices = @transform_7, window_bounds = array<i64: 16, 128>}]} {
    %c0_i32 = arith.constant 0 : i32
    %0 = arith.cmpi eq, %arg0, %c0_i32 : i32
    %1 = arith.extui %0 : i1 to i32
    %c0_i32_0 = arith.constant 0 : i32
    %2 = arith.cmpi ne, %1, %c0_i32_0 : i32
    scf.if %2 {
      %cst_17 = arith.constant 0.000000e+00 : f32
      %27 = vector.broadcast %cst_17 : f32 to vector<16x128xf32>
      %c0_18 = arith.constant 0 : index
      %c0_19 = arith.constant 0 : index
      %28 = vector.load %arg9[%c0_18, %c0_19] : memref<16x128xf32, #tpu.memory_space<vmem>>, vector<16x128xf32>
      tpu.vector_store %arg9[%c0_18, %c0_19], %27 {strides = array<i32>} : memref<16x128xf32, #tpu.memory_space<vmem>>, vector<16x128xf32>,
    } else {
    }
    %c0 = arith.constant 0 : index
    %c0_1 = arith.constant 0 : index
    %3 = vector.load %arg1[%c0, %c0_1] : memref<128x128xi8, #tpu.memory_space<vmem>>, vector<128x128xi8>
    %4 = arith.sitofp %3 : vector<128x128xi8> to vector<128x128xbf16>
    %c0_2 = arith.constant 0 : index
    %c0_3 = arith.constant 0 : index
    %5 = vector.load %arg4[%c0_2, %c0_3] : memref<128x128xbf16, #tpu.memory_space<vmem>>, vector<128x128xbf16>
    %cst = arith.constant dense<0.000000e+00> : vector<128x128xf32>
    %6 = tpu.matmul %4, %5, %cst {dimension_numbers = #tpu.dot_dimension_numbers<[1], [0], [0], [1], [0, 0, 1, 1], [], []>} : vector<128x128xbf16>, vector<128x128xbf16>, vector<128x128xf32> -> vector<128x128xf32>
    %c0_4 = arith.constant 0 : index
    %c0_5 = arith.constant 0 : index
    %7 = vector.load %arg2[%c0_4, %c0_5] : memref<128x1xf32, #tpu.memory_space<vmem>>, vector<128x1xf32>
    %8 = vector.broadcast %7 : vector<128x1xf32> to vector<128x128xf32>
    %9 = arith.mulf %6, %8 : vector<128x128xf32>
    %c0_6 = arith.constant 0 : index
    %c0_7 = arith.constant 0 : index
    %10 = vector.load %arg5[%c0_6, %c0_7] : memref<1x128xf32, #tpu.memory_space<vmem>>, vector<1x128xf32>
    %11 = vector.broadcast %10 : vector<1x128xf32> to vector<128x128xf32>
    %12 = arith.addf %9, %11 : vector<128x128xf32>
    %cst_8 = arith.constant 0.000000e+00 : f32
    %13 = vector.broadcast %cst_8 : f32 to vector<128x128xf32>
    %14 = arith.maximumf %12, %13 : vector<128x128xf32>
    %c128_i32 = arith.constant 128 : i32
    %15 = arith.muli %arg0, %c128_i32 : i32
    %16 = tpu.assume_multiple %15, 128 : i32
    %c0_9 = arith.constant 0 : index
    %c0_10 = arith.constant 0 : index
    %17 = vector.load %arg9[%c0_9, %c0_10] : memref<16x128xf32, #tpu.memory_space<vmem>>, vector<16x128xf32>
    %c0_11 = arith.constant 0 : index
    %18 = arith.index_cast %16 : i32 to index
    %19 = vector.load %arg3[%c0_11, %18] : memref<16x128xbf16, #tpu.memory_space<vmem>>, vector<16x128xbf16>
    %20 = arith.truncf %14 : vector<128x128xf32> to vector<128x128xbf16>
    %cst_12 = arith.constant dense<0.000000e+00> : vector<16x128xf32>
    %21 = tpu.matmul %19, %20, %cst_12 {dimension_numbers = #tpu.dot_dimension_numbers<[1], [0], [0], [1], [0, 0, 1, 1], [], []>} : vector<16x128xbf16>, vector<128x128xbf16>, vector<16x128xf32> -> vector<16x128xf32>
    %22 = arith.addf %17, %21 : vector<16x128xf32>
    %c0_13 = arith.constant 0 : index
    %c0_14 = arith.constant 0 : index
    %23 = vector.load %arg9[%c0_13, %c0_14] : memref<16x128xf32, #tpu.memory_space<vmem>>, vector<16x128xf32>
    tpu.vector_store %arg9[%c0_13, %c0_14], %22 {strides = array<i32>} : memref<16x128xf32, #tpu.memory_space<vmem>>, vector<16x128xf32>,
    %c0_i32_15 = arith.constant 0 : i32
    %24 = arith.cmpi eq, %arg0, %c0_i32_15 : i32
    %25 = arith.extui %24 : i1 to i32
    %c0_i32_16 = arith.constant 0 : i32
    %26 = arith.cmpi ne, %25, %c0_i32_16 : i32
    scf.if %26 {
      %c0_17 = arith.constant 0 : index
      %c0_18 = arith.constant 0 : index
      %27 = vector.load %arg9[%c0_17, %c0_18] : memref<16x128xf32, #tpu.memory_space<vmem>>, vector<16x128xf32>
      %c0_19 = arith.constant 0 : index
      %c0_20 = arith.constant 0 : index
      %28 = vector.load %arg6[%c0_19, %c0_20] : memref<128x128xf32, #tpu.memory_space<vmem>>, vector<128x128xf32>
      %cst_21 = arith.constant dense<0.000000e+00> : vector<16x128xf32>
      %29 = tpu.matmul %27, %28, %cst_21 {dimension_numbers = #tpu.dot_dimension_numbers<[1], [0], [0], [1], [0, 0, 1, 1], [], []>} : vector<16x128xf32>, vector<128x128xf32>, vector<16x128xf32> -> vector<16x128xf32>
      %c0_22 = arith.constant 0 : index
      %c0_23 = arith.constant 0 : index
      %30 = vector.load %arg7[%c0_22, %c0_23] : memref<1x128xf32, #tpu.memory_space<vmem>>, vector<1x128xf32>
      %31 = vector.broadcast %30 : vector<1x128xf32> to vector<16x128xf32>
      %32 = arith.addf %29, %31 : vector<16x128xf32>
      %33 = tpu.iota {dimensions = array<i32: 1>} : vector<16x128xi32>
      %c8_i32 = arith.constant 8 : i32
      %34 = vector.broadcast %c8_i32 : i32 to vector<16x128xi32>
      %35 = arith.cmpi slt, %33, %34 : vector<16x128xi32>
      %cst_24 = arith.constant -1.000000e+30 : f32
      %36 = vector.broadcast %cst_24 : f32 to vector<16x128xf32>
      %37 = arith.select %35, %32, %36 : vector<16x128xi1>, vector<16x128xf32>
      %cst_25 = arith.constant dense<0xFF800000> : vector<16xf32>
      %38 = vector.multi_reduction <maximumf>, %37, %cst_25 [1] : vector<16x128xf32> to vector<16xf32>
      %39 = vector.shape_cast %38 : vector<16xf32> to vector<16x1xf32>
      %40 = vector.broadcast %39 : vector<16x1xf32> to vector<16x128xf32>
      %41 = arith.subf %37, %40 : vector<16x128xf32>
      %42 = math.exp %41 : vector<16x128xf32>
      %cst_26 = arith.constant dense<0.000000e+00> : vector<16xf32>
      %43 = vector.multi_reduction <add>, %42, %cst_26 [1] : vector<16x128xf32> to vector<16xf32>
      %44 = vector.shape_cast %43 : vector<16xf32> to vector<16x1xf32>
      %45 = math.log %44 : vector<16x1xf32>
      %46 = vector.broadcast %45 : vector<16x1xf32> to vector<16x128xf32>
      %47 = arith.subf %41, %46 : vector<16x128xf32>
      %c0_27 = arith.constant 0 : index
      %c0_28 = arith.constant 0 : index
      %48 = vector.load %arg8[%c0_27, %c0_28] : memref<16x128xf32, #tpu.memory_space<vmem>>, vector<16x128xf32>
      tpu.vector_store %arg8[%c0_27, %c0_28], %47 {strides = array<i32>} : memref<16x128xf32, #tpu.memory_space<vmem>>, vector<16x128xf32>,
    } else {
    }
    return
  }
  func.func @transform_0(%arg0: i32) -> (i32, i32) {
    %c0_i32 = arith.constant 0 : i32
    %c0_i32_0 = arith.constant 0 : i32
    return %arg0, %c0_i32 : i32, i32
  }
  func.func @transform_1(%arg0: i32) -> (i32, i32) {
    %c0_i32 = arith.constant 0 : i32
    %c0_i32_0 = arith.constant 0 : i32
    return %arg0, %c0_i32 : i32, i32
  }
  func.func @transform_2(%arg0: i32) -> (i32, i32) {
    %c0_i32 = arith.constant 0 : i32
    %c0_i32_0 = arith.constant 0 : i32
    %c0_i32_1 = arith.constant 0 : i32
    return %c0_i32, %c0_i32_0 : i32, i32
  }
  func.func @transform_3(%arg0: i32) -> (i32, i32) {
    %c0_i32 = arith.constant 0 : i32
    %c0_i32_0 = arith.constant 0 : i32
    %c0_i32_1 = arith.constant 0 : i32
    return %c0_i32, %c0_i32_0 : i32, i32
  }
  func.func @transform_4(%arg0: i32) -> (i32, i32) {
    %c0_i32 = arith.constant 0 : i32
    %c0_i32_0 = arith.constant 0 : i32
    %c0_i32_1 = arith.constant 0 : i32
    return %c0_i32, %c0_i32_0 : i32, i32
  }
  func.func @transform_5(%arg0: i32) -> (i32, i32) {
    %c0_i32 = arith.constant 0 : i32
    %c0_i32_0 = arith.constant 0 : i32
    %c0_i32_1 = arith.constant 0 : i32
    return %c0_i32, %c0_i32_0 : i32, i32
  }
  func.func @transform_6(%arg0: i32) -> (i32, i32) {
    %c0_i32 = arith.constant 0 : i32
    %c0_i32_0 = arith.constant 0 : i32
    %c0_i32_1 = arith.constant 0 : i32
    return %c0_i32, %c0_i32_0 : i32, i32
  }
  func.func @transform_7(%arg0: i32) -> (i32, i32) {
    %c0_i32 = arith.constant 0 : i32
    %c0_i32_0 = arith.constant 0 : i32
    %c0_i32_1 = arith.constant 0 : i32
    return %c0_i32, %c0_i32_0 : i32, i32
  }
}

</mosaic_0001>

<llo_original>
// kernel: tpu_custom_call.1
$region0: #{tpu_custom_call.1}
  #allocation0 [shape = 'u32[]', space=smem, size = 0x4, offset = 0x4, fixed_abs, tag = 'smem constant byte address 0x4 - core index']
  #allocation1 [shape = 'u32[144,128]{1,0:T(1,128)}', space=vmem, size = 0x12000, scoped, tag = 'internal scratch']
  #allocation2 [shape = 'f32[16,128]{1,0:T(8,128)}', space=vmem, size = 0x2000, scoped, tag = 'scratch operand']
  %s0 = inlined_call_operand.hbm [shape: s8[128,128], index: 0, kind: input, shape index: {}]
  %s1 = inlined_call_operand.vmem [shape: f32[128,1], index: 1, kind: input, shape index: {}]
  %s2 = inlined_call_operand.vmem [shape: bf16[16,128], index: 2, kind: input, shape index: {}]
  %s3 = inlined_call_operand.hbm [shape: bf16[128,128], index: 3, kind: input, shape index: {}]
  %s4 = inlined_call_operand.vmem [shape: f32[1,128], index: 4, kind: input, shape index: {}]
  %s5 = inlined_call_operand.vmem [shape: f32[128,128], index: 5, kind: input, shape index: {}]
  %s6 = inlined_call_operand.vmem [shape: f32[1,128], index: 6, kind: input, shape index: {}]
  %s7 = inlined_call_operand.hbm [shape: f32[16,128], index: 7, kind: output, shape index: {}]
  %s8 = sld [smem:[#allocation0]]
  $region54: #{tpu_custom_call.1} parent=0
    _
  %s10 = ssub.s32 1, %s8
  %s11 = scalar_select 0, %s10, %s8
  $region1: #{tpu_custom_call.1} parent=0
    #allocation3 [shape = 'u8[16384]{0}', space=vmem, size = 0x4000, scoped, tag = 'input window, operand 0, single buffered']
    #allocation4 [shape = 's32[1]{0}', space=sflag, size = 0x4, scoped, tag = 'scoped memory for tpu_custom_call.1']
    #allocation5 [shape = 's32[1]{0}', space=sflag, size = 0x4, scoped, tag = 'scoped memory for tpu_custom_call.1']
    #allocation6 [shape = 'u8[32768]{0}', space=vmem, size = 0x8000, scoped, tag = 'input window, operand 3, single buffered']
    #allocation7 [shape = 's32[1]{0}', space=sflag, size = 0x4, scoped, tag = 'scoped memory for tpu_custom_call.1']
    #allocation8 [shape = 'u8[8192]{0}', space=vmem, size = 0x2000, scoped, tag = 'output window, operand 0, single buffered']
    %12 = vsyncpa [#allocation4], 0
    %13 = vsyncpa [#allocation7], 0
    %14 = vsyncpa [#allocation5], 0
    // Predicated region
    $region2: #{tpu_custom_call.1} parent=1 // pred_check
      _
    $region3: #{tpu_custom_call.1} parent=1 // pred_check_branch
      %16 = sbr.rel (0) target = $region5
    $region4: #{tpu_custom_call.1} parent=1 // pred_region
      %s18 = ssub.s32 512, 512
      %19 = vsyncadd [#allocation4], %s18
      %s20 = sshll.u32 [#allocation3], 4
      %s21 = int_to_ptr.vmem [resolvable:$true] %s20
      %26 = dma.hbm_to_vmem [thread:$0]  %s0, 512, %s21, [#allocation4], 128, 128, 8
    $region5: #{tpu_custom_call.1} parent=1 // pred_fallthru
      _
    // Predicated region
    $region6: #{tpu_custom_call.1} parent=1 // pred_check
      _
    $region7: #{tpu_custom_call.1} parent=1 // pred_check_branch
      %28 = sbr.rel (0) target = $region9
    $region8: #{tpu_custom_call.1} parent=1 // pred_region
      _
    $region9: #{tpu_custom_call.1} parent=1 // pred_fallthru
      _
    // Predicated region
    $region10: #{tpu_custom_call.1} parent=1 // pred_check
      _
    $region11: #{tpu_custom_call.1} parent=1 // pred_check_branch
      %30 = sbr.rel (0) target = $region13
    $region12: #{tpu_custom_call.1} parent=1 // pred_region
      _
    $region13: #{tpu_custom_call.1} parent=1 // pred_fallthru
      _
    // Predicated region
    $region14: #{tpu_custom_call.1} parent=1 // pred_check
      _
    $region15: #{tpu_custom_call.1} parent=1 // pred_check_branch
      %32 = sbr.rel (0) target = $region17
    $region16: #{tpu_custom_call.1} parent=1 // pred_region
      %s34 = ssub.s32 1024, 1024
      %35 = vsyncadd [#allocation7], %s34
      %s36 = sshll.u32 [#allocation6], 4
      %s37 = int_to_ptr.vmem [resolvable:$true] %s36
      %42 = dma.hbm_to_vmem [thread:$0]  %s3, 1024, %s37, [#allocation7], 64, 64, 4
    $region17: #{tpu_custom_call.1} parent=1 // pred_fallthru
      _
    // Predicated region
    $region18: #{tpu_custom_call.1} parent=1 // pred_check
      _
    $region19: #{tpu_custom_call.1} parent=1 // pred_check_branch
      %44 = sbr.rel (0) target = $region21
    $region20: #{tpu_custom_call.1} parent=1 // pred_region
      _
    $region21: #{tpu_custom_call.1} parent=1 // pred_fallthru
      _
    // Predicated region
    $region22: #{tpu_custom_call.1} parent=1 // pred_check
      _
    $region23: #{tpu_custom_call.1} parent=1 // pred_check_branch
      %46 = sbr.rel (0) target = $region25
    $region24: #{tpu_custom_call.1} parent=1 // pred_region
      _
    $region25: #{tpu_custom_call.1} parent=1 // pred_fallthru
      _
    // Predicated region
    $region26: #{tpu_custom_call.1} parent=1 // pred_check
      _
    $region27: #{tpu_custom_call.1} parent=1 // pred_check_branch
      %48 = sbr.rel (0) target = $region29
    $region28: #{tpu_custom_call.1} parent=1 // pred_region
      _
    $region29: #{tpu_custom_call.1} parent=1 // pred_fallthru
      _
    // Predicated region
    $region30: #{tpu_custom_call.1} parent=1 // pred_check
      _
    $region31: #{tpu_custom_call.1} parent=1 // pred_check_branch
      %50 = sbr.rel (0) target = $region33
    $region32: #{tpu_custom_call.1} parent=1 // pred_region
      %51 = dma.done [#allocation4], 512
    $region33: #{tpu_custom_call.1} parent=1 // pred_fallthru
      _
    // Predicated region
    $region34: #{tpu_custom_call.1} parent=1 // pred_check
      _
    $region35: #{tpu_custom_call.1} parent=1 // pred_check_branch
      %53 = sbr.rel (0) target = $region37
    $region36: #{tpu_custom_call.1} parent=1 // pred_region
      %54 = dma.done [#allocation7], 1024
    $region37: #{tpu_custom_call.1} parent=1 // pred_fallthru
      _
    %p56 = scmp.eq.s32.totalorder 0, 0
    // Predicated region
    $region38: #{tpu_custom_call.1} parent=1 // pred_check
      %p57 = pneg %p56
    $region39: #{tpu_custom_call.1} parent=1 // pred_check_branch
      %59 = sbr.rel (%p57) target = $region41
    $region40: #{tpu_custom_call.1} parent=1 // pred_region
      %60 = vst [vmem:[#allocation2] sm:$0xff] 0.0
      %61 = vst [vmem:[#allocation2 + $0x8] sm:$0xff] 0.0
    $region41: #{tpu_custom_call.1} parent=1 // pred_fallthru
      _
    %v62 = vld [vmem:[#allocation3] sm:$0xff]
    %v63 = vld [vmem:[#allocation3 + $0x8] sm:$0xff]
    %v64 = vld [vmem:[#allocation3 + $0x10] sm:$0xff]
    %v65 = vld [vmem:[#allocation3 + $0x18] sm:$0xff]
    %v66 = vunpack.c.l.s8.bf16 %v62
    %v67 = vunpack.c.h.s8.bf16 %v62
    %v68 = vunpack.c.l.s8.bf16 %v63
    %v69 = vunpack.c.h.s8.bf16 %v63
    %v70 = vunpack.c.l.s8.bf16 %v64
    %v71 = vunpack.c.h.s8.bf16 %v64
    %v72 = vunpack.c.l.s8.bf16 %v65
    %v73 = vunpack.c.h.s8.bf16 %v65
    %v74 = vld [vmem:[#allocation6] sm:$0xf]
    %v75 = vld [vmem:[#allocation6 + $0x4] sm:$0xf]
    %v76 = vld [vmem:[#allocation6 + $0x8] sm:$0xf]
    %v77 = vld [vmem:[#allocation6 + $0xc] sm:$0xf]
    %v78 = vld [vmem:[#allocation6 + $0x10] sm:$0xf]
    %v79 = vld [vmem:[#allocation6 + $0x14] sm:$0xf]
    %v80 = vld [vmem:[#allocation6 + $0x18] sm:$0xf]
    %v81 = vld [vmem:[#allocation6 + $0x1c] sm:$0xf]
    %v82 = vld [vmem:[#allocation6 + $0x20] sm:$0xf]
    %v83 = vld [vmem:[#allocation6 + $0x24] sm:$0xf]
    %v84 = vld [vmem:[#allocation6 + $0x28] sm:$0xf]
    %v85 = vld [vmem:[#allocation6 + $0x2c] sm:$0xf]
    %v86 = vld [vmem:[#allocation6 + $0x30] sm:$0xf]
    %v87 = vld [vmem:[#allocation6 + $0x34] sm:$0xf]
    %v88 = vld [vmem:[#allocation6 + $0x38] sm:$0xf]
    %v89 = vld [vmem:[#allocation6 + $0x3c] sm:$0xf]
    %v106 = vunpack.c.l.b16 %v74
    %v107 = vunpack.c.l.b16 %v75
    %v108 = vunpack.c.l.b16 %v76
    %v109 = vunpack.c.l.b16 %v77
    %v110 = vunpack.c.l.b16 %v78
    %v111 = vunpack.c.l.b16 %v79
    %v112 = vunpack.c.l.b16 %v80
    %v113 = vunpack.c.l.b16 %v81
    %v114 = vunpack.c.l.b16 %v82
    %v115 = vunpack.c.l.b16 %v83
    %v116 = vunpack.c.l.b16 %v84
    %v117 = vunpack.c.l.b16 %v85
    %v118 = vunpack.c.l.b16 %v86
    %v119 = vunpack.c.l.b16 %v87
    %v120 = vunpack.c.l.b16 %v88
    %v121 = vunpack.c.l.b16 %v89
    %v122 = vpack.c.b16 %v107, %v106
    %v123 = vpack.c.b16 %v109, %v108
    %v124 = vpack.c.b16 %v111, %v110
    %v125 = vpack.c.b16 %v113, %v112
    %v126 = vpack.c.b16 %v115, %v114
    %v127 = vpack.c.b16 %v117, %v116
    %v128 = vpack.c.b16 %v119, %v118
    %v129 = vpack.c.b16 %v121, %v120
    %138 = vmatprep.subr.bf16.mxu0 0
    %139 = vmatpush1.bf16.msra.mxu0 %v129
    %140 = vmatprep.subr.bf16.mxu0 0
    %141 = vmatpush1.bf16.msra.mxu0 %v128
    %142 = vmatprep.subr.bf16.mxu0 0
    %143 = vmatpush1.bf16.msra.mxu0 %v127
    %144 = vmatprep.subr.bf16.mxu0 0
    %145 = vmatpush1.bf16.msra.mxu0 %v126
    %146 = vmatprep.subr.bf16.mxu0 0
    %147 = vmatpush1.bf16.msra.mxu0 %v125
    %148 = vmatprep.subr.bf16.mxu0 0
    %149 = vmatpush1.bf16.msra.mxu0 %v124
    %150 = vmatprep.subr.bf16.mxu0 0
    %151 = vmatpush1.bf16.msra.mxu0 %v123
    %152 = vmatprep.subr.bf16.mxu0 0
    %153 = vmatpush1.bf16.msra.mxu0 %v122
    %154 = vmatprep.subr.bf16.mxu0 0
    %155 = vmatpush2.bf16.msra.mxu0 0
    %156 = vmatprep.subr.bf16.mxu0 0
    %157 = vmatpush2.bf16.msra.mxu0 0
    %158 = vmatprep.subr.bf16.mxu0 0
    %159 = vmatpush2.bf16.msra.mxu0 0
    %160 = vmatprep.subr.bf16.mxu0 0
    %161 = vmatpush2.bf16.msra.mxu0 0
    %162 = vmatprep.subr.bf16.mxu0 0
    %163 = vmatpush2.bf16.msra.mxu0 0
    %164 = vmatprep.subr.bf16.mxu0 0
    %165 = vmatpush2.bf16.msra.mxu0 0
    %166 = vmatprep.subr.bf16.mxu0 0
    %167 = vmatpush2.bf16.msra.mxu0 0
    %168 = vmatprep.subr.bf16.mxu0 0
    %169 = vmatpush2.bf16.msra.mxu0 0
    %170 = vmatprep.mubr.bf16.mxu0 0
    %171 = vmatmul.mubr.bf16.gmra.mxu0 %v66
    %v172 = vpop.f32.mrf.mxu0
    %v173 = vadd.f32 0.0, %v172
    %v174 = vpop.f32.mrf.mxu0
    %v175 = vpop.f32.mrf.mxu0
    %v176 = vadd.f32 0.0, %v175
    %v177 = vpop.f32.mrf.mxu0
    %178 = vmatprep.mubr.bf16.mxu0 0
    %179 = vmatmul.mubr.bf16.gmra.mxu0 %v67
    %v180 = vpop.f32.mrf.mxu0
    %v181 = vadd.f32 0.0, %v180
    %v182 = vpop.f32.mrf.mxu0
    %v183 = vpop.f32.mrf.mxu0
    %v184 = vadd.f32 0.0, %v183
    %v185 = vpop.f32.mrf.mxu0
    %186 = vmatprep.mubr.bf16.mxu0 0
    %187 = vmatmul.mubr.bf16.gmra.mxu0 %v68
    %v188 = vpop.f32.mrf.mxu0
    %v189 = vadd.f32 0.0, %v188
    %v190 = vpop.f32.mrf.mxu0
    %v191 = vpop.f32.mrf.mxu0
    %v192 = vadd.f32 0.0, %v191
    %v193 = vpop.f32.mrf.mxu0
    %194 = vmatprep.mubr.bf16.mxu0 0
    %195 = vmatmul.mubr.bf16.gmra.mxu0 %v69
    %v196 = vpop.f32.mrf.mxu0
    %v197 = vadd.f32 0.0, %v196
    %v198 = vpop.f32.mrf.mxu0
    %v199 = vpop.f32.mrf.mxu0
    %v200 = vadd.f32 0.0, %v199
    %v201 = vpop.f32.mrf.mxu0
    %202 = vmatprep.mubr.bf16.mxu0 0
    %203 = vmatmul.mubr.bf16.gmra.mxu0 %v70
    %v204 = vpop.f32.mrf.mxu0
    %v205 = vadd.f32 0.0, %v204
    %v206 = vpop.f32.mrf.mxu0
    %v207 = vpop.f32.mrf.mxu0
    %v208 = vadd.f32 0.0, %v207
    %v209 = vpop.f32.mrf.mxu0
    %210 = vmatprep.mubr.bf16.mxu0 0
    %211 = vmatmul.mubr.bf16.gmra.mxu0 %v71
    %v212 = vpop.f32.mrf.mxu0
    %v213 = vadd.f32 0.0, %v212
    %v214 = vpop.f32.mrf.mxu0
    %v215 = vpop.f32.mrf.mxu0
    %v216 = vadd.f32 0.0, %v215
    %v217 = vpop.f32.mrf.mxu0
    %218 = vmatprep.mubr.bf16.mxu0 0
    %219 = vmatmul.mubr.bf16.gmra.mxu0 %v72
    %v220 = vpop.f32.mrf.mxu0
    %v221 = vadd.f32 0.0, %v220
    %v222 = vpop.f32.mrf.mxu0
    %v223 = vpop.f32.mrf.mxu0
    %v224 = vadd.f32 0.0, %v223
    %v225 = vpop.f32.mrf.mxu0
    %226 = vmatprep.mubr.bf16.mxu0 0
    %227 = vmatmul.mubr.bf16.gmra.mxu0 %v73
    %v228 = vpop.f32.mrf.mxu0
    %v229 = vadd.f32 0.0, %v228
    %v230 = vpop.f32.mrf.mxu0
    %v231 = vpop.f32.mrf.mxu0
    %v232 = vadd.f32 0.0, %v231
    %v233 = vpop.f32.mrf.mxu0
    %234 = vdwg.mxu0
    %v235 = vld [vmem:[%s1] sm:$0xff]
    %v236 = vld [vmem:[%s1 + $0x8] sm:$0xff]
    %v237 = vld [vmem:[%s1 + $0x10] sm:$0xff]
    %v238 = vld [vmem:[%s1 + $0x18] sm:$0xff]
    %v239 = vld [vmem:[%s1 + $0x20] sm:$0xff]
    %v240 = vld [vmem:[%s1 + $0x28] sm:$0xff]
    %v241 = vld [vmem:[%s1 + $0x30] sm:$0xff]
    %v242 = vld [vmem:[%s1 + $0x38] sm:$0xff]
    %v243 = vld [vmem:[%s1 + $0x40] sm:$0xff]
    %v244 = vld [vmem:[%s1 + $0x48] sm:$0xff]
    %v245 = vld [vmem:[%s1 + $0x50] sm:$0xff]
    %v246 = vld [vmem:[%s1 + $0x58] sm:$0xff]
    %v247 = vld [vmem:[%s1 + $0x60] sm:$0xff]
    %v248 = vld [vmem:[%s1 + $0x68] sm:$0xff]
    %v249 = vld [vmem:[%s1 + $0x70] sm:$0xff]
    %v250 = vld [vmem:[%s1 + $0x78] sm:$0xff]
    %252 = vset.pattern.permute.xlu0 0
    %253 = vperm.xlu0 %252, %v235
    %v254 = vpop.permute.xlu0 %253
    %257 = vset.pattern.permute.xlu0 0
    %258 = vperm.xlu0 %257, %v236
    %v259 = vpop.permute.xlu0 %258
    %262 = vset.pattern.permute.xlu0 0
    %263 = vperm.xlu0 %262, %v237
    %v264 = vpop.permute.xlu0 %263
    %267 = vset.pattern.permute.xlu0 0
    %268 = vperm.xlu0 %267, %v238
    %v269 = vpop.permute.xlu0 %268
    %272 = vset.pattern.permute.xlu0 0
    %273 = vperm.xlu0 %272, %v239
    %v274 = vpop.permute.xlu0 %273
    %277 = vset.pattern.permute.xlu0 0
    %278 = vperm.xlu0 %277, %v240
    %v279 = vpop.permute.xlu0 %278
    %282 = vset.pattern.permute.xlu0 0
    %283 = vperm.xlu0 %282, %v241
    %v284 = vpop.permute.xlu0 %283
    %287 = vset.pattern.permute.xlu0 0
    %288 = vperm.xlu0 %287, %v242
    %v289 = vpop.permute.xlu0 %288
    %292 = vset.pattern.permute.xlu0 0
    %293 = vperm.xlu0 %292, %v243
    %v294 = vpop.permute.xlu0 %293
    %297 = vset.pattern.permute.xlu0 0
    %298 = vperm.xlu0 %297, %v244
    %v299 = vpop.permute.xlu0 %298
    %302 = vset.pattern.permute.xlu0 0
    %303 = vperm.xlu0 %302, %v245
    %v304 = vpop.permute.xlu0 %303
    %307 = vset.pattern.permute.xlu0 0
    %308 = vperm.xlu0 %307, %v246
    %v309 = vpop.permute.xlu0 %308
    %312 = vset.pattern.permute.xlu0 0
    %313 = vperm.xlu0 %312, %v247
    %v314 = vpop.permute.xlu0 %313
    %317 = vset.pattern.permute.xlu0 0
    %318 = vperm.xlu0 %317, %v248
    %v319 = vpop.permute.xlu0 %318
    %322 = vset.pattern.permute.xlu0 0
    %323 = vperm.xlu0 %322, %v249
    %v324 = vpop.permute.xlu0 %323
    %327 = vset.pattern.permute.xlu0 0
    %328 = vperm.xlu0 %327, %v250
    %v329 = vpop.permute.xlu0 %328
    %v331 = vmul.f32 %v173, %v254
    %v332 = vmul.f32 %v176, %v259
    %v333 = vmul.f32 %v181, %v264
    %v334 = vmul.f32 %v184, %v269
    %v335 = vmul.f32 %v189, %v274
    %v336 = vmul.f32 %v192, %v279
    %v337 = vmul.f32 %v197, %v284
    %v338 = vmul.f32 %v200, %v289
    %v339 = vmul.f32 %v205, %v294
    %v340 = vmul.f32 %v208, %v299
    %v341 = vmul.f32 %v213, %v304
    %v342 = vmul.f32 %v216, %v309
    %v343 = vmul.f32 %v221, %v314
    %v344 = vmul.f32 %v224, %v319
    %v345 = vmul.f32 %v229, %v324
    %v346 = vmul.f32 %v232, %v329
    %v347 = vld [vmem:[%s4] sm:$0x1]
    %v349 = vlaneseq
    %v350 = vshrl.u32 %v349, 7
    %v351 = vsub.s32 0, %v350
    %v352 = vrot.slane %v347, %v351
    %v354 = vadd.f32 %v331, %v352
    %v355 = vadd.f32 %v332, %v352
    %v356 = vadd.f32 %v333, %v352
    %v357 = vadd.f32 %v334, %v352
    %v358 = vadd.f32 %v335, %v352
    %v359 = vadd.f32 %v336, %v352
    %v360 = vadd.f32 %v337, %v352
    %v361 = vadd.f32 %v338, %v352
    %v362 = vadd.f32 %v339, %v352
    %v363 = vadd.f32 %v340, %v352
    %v364 = vadd.f32 %v341, %v352
    %v365 = vadd.f32 %v342, %v352
    %v366 = vadd.f32 %v343, %v352
    %v367 = vadd.f32 %v344, %v352
    %v368 = vadd.f32 %v345, %v352
    %v369 = vadd.f32 %v346, %v352
    %v370 = vmax.f32 %v354, 0.0
    %v371 = vmax.f32 %v355, 0.0
    %v372 = vmax.f32 %v356, 0.0
    %v373 = vmax.f32 %v357, 0.0
    %v374 = vmax.f32 %v358, 0.0
    %v375 = vmax.f32 %v359, 0.0
    %v376 = vmax.f32 %v360, 0.0
    %v377 = vmax.f32 %v361, 0.0
    %v378 = vmax.f32 %v362, 0.0
    %v379 = vmax.f32 %v363, 0.0
    %v380 = vmax.f32 %v364, 0.0
    %v381 = vmax.f32 %v365, 0.0
    %v382 = vmax.f32 %v366, 0.0
    %v383 = vmax.f32 %v367, 0.0
    %v384 = vmax.f32 %v368, 0.0
    %v385 = vmax.f32 %v369, 0.0
    %s386 = smul.u32 0, 128
    %v387 = vld [vmem:[#allocation2] sm:$0xff]
    %v388 = vld [vmem:[#allocation2 + $0x8] sm:$0xff]
    %s389 = sshra.s32 %s386, 7
    %s390 = sand.u32 %s386, 127
    %s391 = smul.addr %s389, 4
    %s392 = scalar_lea.vmem %s2, %s391
    %v393 = vld [vmem:[%s392] sm:$0xf]
    %v394 = vld [vmem:[%s392 + $0x4] sm:$0xf]
    %v395 = vpack.c.bf16 %v371, %v370
    %v396 = vpack.c.bf16 %v373, %v372
    %v397 = vpack.c.bf16 %v375, %v374
    %v398 = vpack.c.bf16 %v377, %v376
    %v399 = vpack.c.bf16 %v379, %v378
    %v400 = vpack.c.bf16 %v381, %v380
    %v401 = vpack.c.bf16 %v383, %v382
    %v402 = vpack.c.bf16 %v385, %v384
    %v405 = vunpack.c.l.b16 %v393
    %v406 = vunpack.c.l.b16 %v394
    %v407 = vpack.c.b16 %v406, %v405
    %409 = vmatprep.subr.bf16.mxu0 0
    %410 = vmatpush1.bf16.msra.mxu0 %v402
    %411 = vmatprep.subr.bf16.mxu0 0
    %412 = vmatpush1.bf16.msra.mxu0 %v401
    %413 = vmatprep.subr.bf16.mxu0 0
    %414 = vmatpush1.bf16.msra.mxu0 %v400
    %415 = vmatprep.subr.bf16.mxu0 0
    %416 = vmatpush1.bf16.msra.mxu0 %v399
    %417 = vmatprep.subr.bf16.mxu0 0
    %418 = vmatpush1.bf16.msra.mxu0 %v398
    %419 = vmatprep.subr.bf16.mxu0 0
    %420 = vmatpush1.bf16.msra.mxu0 %v397
    %421 = vmatprep.subr.bf16.mxu0 0
    %422 = vmatpush1.bf16.msra.mxu0 %v396
    %423 = vmatprep.subr.bf16.mxu0 0
    %424 = vmatpush1.bf16.msra.mxu0 %v395
    %425 = vmatprep.subr.bf16.mxu0 0
    %426 = vmatpush2.bf16.msra.mxu0 0
    %427 = vmatprep.subr.bf16.mxu0 0
    %428 = vmatpush2.bf16.msra.mxu0 0
    %429 = vmatprep.subr.bf16.mxu0 0
    %430 = vmatpush2.bf16.msra.mxu0 0
    %431 = vmatprep.subr.bf16.mxu0 0
    %432 = vmatpush2.bf16.msra.mxu0 0
    %433 = vmatprep.subr.bf16.mxu0 0
    %434 = vmatpush2.bf16.msra.mxu0 0
    %435 = vmatprep.subr.bf16.mxu0 0
    %436 = vmatpush2.bf16.msra.mxu0 0
    %437 = vmatprep.subr.bf16.mxu0 0
    %438 = vmatpush2.bf16.msra.mxu0 0
    %439 = vmatprep.subr.bf16.mxu0 0
    %440 = vmatpush2.bf16.msra.mxu0 0
    %441 = vmatprep.mubr.bf16.mxu0 0
    %442 = vmatmul.mubr.bf16.gmra.mxu0 %v407
    %v443 = vpop.f32.mrf.mxu0
    %v444 = vadd.f32 0.0, %v443
    %v445 = vpop.f32.mrf.mxu0
    %v446 = vpop.f32.mrf.mxu0
    %v447 = vadd.f32 0.0, %v446
    %v448 = vpop.f32.mrf.mxu0
    %449 = vdwg.mxu0
    %v450 = vadd.f32 %v387, %v444
    %v451 = vadd.f32 %v388, %v447
    %452 = vst [vmem:[#allocation2] sm:$0xff] %v450
    %453 = vst [vmem:[#allocation2 + $0x8] sm:$0xff] %v451
    // Predicated region
    $region42: #{tpu_custom_call.1} parent=1 // pred_check
      %p454 = pneg %p56
    $region43: #{tpu_custom_call.1} parent=1 // pred_check_branch
      %456 = sbr.rel (%p454) target = $region45
    $region44: #{tpu_custom_call.1} parent=1 // pred_region
      %v457 = vld [vmem:[#allocation2] sm:$0xff]
      %v458 = vld [vmem:[#allocation2 + $0x8] sm:$0xff]
      %v459 = vld [vmem:[%s5] sm:$0xff]
      %v460 = vld [vmem:[%s5 + $0x8] sm:$0xff]
      %v461 = vld [vmem:[%s5 + $0x10] sm:$0xff]
      %v462 = vld [vmem:[%s5 + $0x18] sm:$0xff]
      %v463 = vld [vmem:[%s5 + $0x20] sm:$0xff]
      %v464 = vld [vmem:[%s5 + $0x28] sm:$0xff]
      %v465 = vld [vmem:[%s5 + $0x30] sm:$0xff]
      %v466 = vld [vmem:[%s5 + $0x38] sm:$0xff]
      %v467 = vld [vmem:[%s5 + $0x40] sm:$0xff]
      %v468 = vld [vmem:[%s5 + $0x48] sm:$0xff]
      %v469 = vld [vmem:[%s5 + $0x50] sm:$0xff]
      %v470 = vld [vmem:[%s5 + $0x58] sm:$0xff]
      %v471 = vld [vmem:[%s5 + $0x60] sm:$0xff]
      %v472 = vld [vmem:[%s5 + $0x68] sm:$0xff]
      %v473 = vld [vmem:[%s5 + $0x70] sm:$0xff]
      %v474 = vld [vmem:[%s5 + $0x78] sm:$0xff]
      %v475 = vld [vmem:[%s6] sm:$0x1]
      %v477 = vlaneseq
      %v478 = vshrl.u32 %v477, 7
      %v479 = vsub.s32 0, %v478
      %v480 = vrot.slane %v475, %v479
      %482 = vmatprep.subr.mxu0 0.0
      %483 = vmatpush1.msra.mxu0 %v474
      %484 = vmatprep.subr.mxu0 0.0
      %485 = vmatpush1.msra.mxu0 %v473
      %486 = vmatprep.subr.mxu0 0.0
      %487 = vmatpush1.msra.mxu0 %v472
      %488 = vmatprep.subr.mxu0 0.0
      %489 = vmatpush1.msra.mxu0 %v471
      %490 = vmatprep.subr.mxu0 0.0
      %491 = vmatpush1.msra.mxu0 %v470
      %492 = vmatprep.subr.mxu0 0.0
      %493 = vmatpush1.msra.mxu0 %v469
      %494 = vmatprep.subr.mxu0 0.0
      %495 = vmatpush1.msra.mxu0 %v468
      %496 = vmatprep.subr.mxu0 0.0
      %497 = vmatpush1.msra.mxu0 %v467
      %498 = vmatprep.subr.mxu0 0.0
      %499 = vmatpush1.msra.mxu0 %v466
      %500 = vmatprep.subr.mxu0 0.0
      %501 = vmatpush1.msra.mxu0 %v465
      %502 = vmatprep.subr.mxu0 0.0
      %503 = vmatpush1.msra.mxu0 %v464
      %504 = vmatprep.subr.mxu0 0.0
      %505 = vmatpush1.msra.mxu0 %v463
      %506 = vmatprep.subr.mxu0 0.0
      %507 = vmatpush1.msra.mxu0 %v462
      %508 = vmatprep.subr.mxu0 0.0
      %509 = vmatpush1.msra.mxu0 %v461
      %510 = vmatprep.subr.mxu0 0.0
      %511 = vmatpush1.msra.mxu0 %v460
      %512 = vmatprep.subr.mxu0 0.0
      %513 = vmatpush1.msra.mxu0 %v459
      %514 = vmatprep.subr.mxu0 0.0
      %515 = vmatpush2.msra.mxu0 0.0
      %516 = vmatprep.subr.mxu0 0.0
      %517 = vmatpush2.msra.mxu0 0.0
      %518 = vmatprep.subr.mxu0 0.0
      %519 = vmatpush2.msra.mxu0 0.0
      %520 = vmatprep.subr.mxu0 0.0
      %521 = vmatpush2.msra.mxu0 0.0
      %522 = vmatprep.subr.mxu0 0.0
      %523 = vmatpush2.msra.mxu0 0.0
      %524 = vmatprep.subr.mxu0 0.0
      %525 = vmatpush2.msra.mxu0 0.0
      %526 = vmatprep.subr.mxu0 0.0
      %527 = vmatpush2.msra.mxu0 0.0
      %528 = vmatprep.subr.mxu0 0.0
      %529 = vmatpush2.msra.mxu0 0.0
      %530 = vmatprep.subr.mxu0 0.0
      %531 = vmatpush2.msra.mxu0 0.0
      %532 = vmatprep.subr.mxu0 0.0
      %533 = vmatpush2.msra.mxu0 0.0
      %534 = vmatprep.subr.mxu0 0.0
      %535 = vmatpush2.msra.mxu0 0.0
      %536 = vmatprep.subr.mxu0 0.0
      %537 = vmatpush2.msra.mxu0 0.0
      %538 = vmatprep.subr.mxu0 0.0
      %539 = vmatpush2.msra.mxu0 0.0
      %540 = vmatprep.subr.mxu0 0.0
      %541 = vmatpush2.msra.mxu0 0.0
      %542 = vmatprep.subr.mxu0 0.0
      %543 = vmatpush2.msra.mxu0 0.0
      %544 = vmatprep.subr.mxu0 0.0
      %545 = vmatpush2.msra.mxu0 0.0
      %546 = vmatprep.mubr.f32.mxu0 0.0
      %547 = vmatmul.mubr.f32.gmra.mxu0 %v457
      %v548 = vpop.f32.mrf.mxu0
      %v549 = vadd.f32 %v480, %v548
      %v550 = vpop.f32.mrf.mxu0
      %551 = vmatprep.mubr.f32.mxu0 0.0
      %552 = vmatmul.mubr.f32.gmra.mxu0 %v458
      %v553 = vpop.f32.mrf.mxu0
      %v554 = vadd.f32 %v480, %v553
      %v555 = vpop.f32.mrf.mxu0
      %556 = vdwg.mxu0
      %v557 = vlaneseq
      %v558 = vand.u32 %v557, 127
      %vm559 = vcmp.lt.s32.totalorder %v558, 8
      %v560 = vsel %vm559, %v549, -1e+30
      %v561 = vsel %vm559, %v554, -1e+30
      %562 = vmax.xlane.f32.xlu0 %v560
      %v563 = vpop.xlane.xlu0 %562
      %564 = vmax.xlane.f32.xlu0 %v561
      %v565 = vpop.xlane.xlu0 %564
      %v566 = vsub.f32 %v560, %v563
      %v567 = vsub.f32 %v561, %v565
      %v568 = vmul.f32 %v566, 1.442695
      %v569 = vpow.pop %v568
      %v570 = vmul.f32 %v567, 1.442695
      %v571 = vpow.pop %v570
      %572 = vadd.xlane.f32.xlu0 %v569
      %v573 = vpop.xlane.xlu0 %572
      %574 = vadd.xlane.f32.xlu0 %v571
      %v575 = vpop.xlane.xlu0 %574
      %v576 = vlog2.pop %v573
      %v577 = vmul.f32 %v576, 0.6931472
      %v578 = vlog2.pop %v575
      %v579 = vmul.f32 %v578, 0.6931472
      %v580 = vsub.f32 %v566, %v577
      %v581 = vsub.f32 %v567, %v579
      %582 = vst [vmem:[#allocation8] sm:$0xff] %v580
      %583 = vst [vmem:[#allocation8 + $0x8] sm:$0xff] %v581
    $region45: #{tpu_custom_call.1} parent=1 // pred_fallthru
      _
    // Predicated region
    $region46: #{tpu_custom_call.1} parent=1 // pred_check
      _
    $region47: #{tpu_custom_call.1} parent=1 // pred_check_branch
      %585 = sbr.rel (0) target = $region49
    $region48: #{tpu_custom_call.1} parent=1 // pred_region
      %s587 = ssub.s32 256, 256
      %588 = vsyncadd [#allocation5], %s587
      %s589 = sshll.u32 [#allocation8], 4
      %s590 = int_to_ptr.vmem [resolvable:$true] %s589
      %595 = dma.vmem_to_hbm [thread:$0]  %s590, 256, %s7, [#allocation5], 128, 128, 8
    $region49: #{tpu_custom_call.1} parent=1 // pred_fallthru
      _
    // Predicated region
    $region50: #{tpu_custom_call.1} parent=1 // pred_check
      _
    $region51: #{tpu_custom_call.1} parent=1 // pred_check_branch
      %597 = sbr.rel (0) target = $region53
    $region52: #{tpu_custom_call.1} parent=1 // pred_region
      %598 = dma.done [#allocation5], 256
    $region53: #{tpu_custom_call.1} parent=1 // pred_fallthru
      _
    %599 = vsyncpa [#allocation4], 1
    %600 = vsyncpa [#allocation7], 1
    %601 = vsyncpa [#allocation5], 1

// kernel: tpu_custom_call.1
$region0: #{tpu_custom_call.1}
  #allocation0 [shape = 'u32[]', space=smem, size = 0x4, offset = 0x4, fixed_abs, tag = 'smem constant byte address 0x4 - core index']
  #allocation1 [shape = 'u32[144,128]{1,0:T(1,128)}', space=vmem, size = 0x12000, scoped, tag = 'internal scratch']
  #allocation2 [shape = 'f32[16,128]{1,0:T(8,128)}', space=vmem, size = 0x2000, scoped, tag = 'scratch operand']
  %s0 = inlined_call_operand.hbm [shape: s8[128,128], index: 0, kind: input, shape index: {}]
  %s1 = inlined_call_operand.vmem [shape: f32[128,1], index: 1, kind: input, shape index: {}]
  %s2 = inlined_call_operand.vmem [shape: bf16[16,128], index: 2, kind: input, shape index: {}]
  %s3 = inlined_call_operand.hbm [shape: bf16[128,128], index: 3, kind: input, shape index: {}]
  %s4 = inlined_call_operand.vmem [shape: f32[1,128], index: 4, kind: input, shape index: {}]
  %s5 = inlined_call_operand.vmem [shape: f32[128,128], index: 5, kind: input, shape index: {}]
  %s6 = inlined_call_operand.vmem [shape: f32[1,128], index: 6, kind: input, shape index: {}]
  %s7 = inlined_call_operand.hbm [shape: f32[16,128], index: 7, kind: output, shape index: {}]
  %s8 = sld [smem:[#allocation0]]
  $region54: #{tpu_custom_call.1} parent=0
    _
  %s10 = ssub.s32 1, %s8
  %s11 = scalar_select 0, %s10, %s8
  $region1: #{tpu_custom_call.1} parent=0
    #allocation3 [shape = 'u8[16384]{0}', space=vmem, size = 0x4000, scoped, tag = 'input window, operand 0, single buffered']
    #allocation4 [shape = 's32[1]{0}', space=sflag, size = 0x4, scoped, tag = 'scoped memory for tpu_custom_call.1']
    #allocation5 [shape = 's32[1]{0}', space=sflag, size = 0x4, scoped, tag = 'scoped memory for tpu_custom_call.1']
    #allocation6 [shape = 'u8[32768]{0}', space=vmem, size = 0x8000, scoped, tag = 'input window, operand 3, single buffered']
    #allocation7 [shape = 's32[1]{0}', space=sflag, size = 0x4, scoped, tag = 'scoped memory for tpu_custom_call.1']
    #allocation8 [shape = 'u8[8192]{0}', space=vmem, size = 0x2000, scoped, tag = 'output window, operand 0, single buffered']
    %12 = vsyncpa [#allocation4], 0
    %13 = vsyncpa [#allocation7], 0
    %14 = vsyncpa [#allocation5], 0
    // Predicated region
    $region2: #{tpu_custom_call.1} parent=1 // pred_check
      _
    $region3: #{tpu_custom_call.1} parent=1 // pred_check_branch
      %16 = sbr.rel (0) target = $region5
    $region4: #{tpu_custom_call.1} parent=1 // pred_region
      %s18 = ssub.s32 512, 512
      %19 = vsyncadd [#allocation4], %s18
      %s20 = sshll.u32 [#allocation3], 4
      %s21 = int_to_ptr.vmem [resolvable:$true] %s20
      %26 = dma.hbm_to_vmem [thread:$0]  %s0, 512, %s21, [#allocation4], 128, 128, 8
    $region5: #{tpu_custom_call.1} parent=1 // pred_fallthru
      _
    // Predicated region
    $region6: #{tpu_custom_call.1} parent=1 // pred_check
      _
    $region7: #{tpu_custom_call.1} parent=1 // pred_check_branch
      %28 = sbr.rel (0) target = $region9
    $region8: #{tpu_custom_call.1} parent=1 // pred_region
      _
    $region9: #{tpu_custom_call.1} parent=1 // pred_fallthru
      _
    // Predicated region
    $region10: #{tpu_custom_call.1} parent=1 // pred_check
      _
    $region11: #{tpu_custom_call.1} parent=1 // pred_check_branch
      %30 = sbr.rel (0) target = $region13
    $region12: #{tpu_custom_call.1} parent=1 // pred_region
      _
    $region13: #{tpu_custom_call.1} parent=1 // pred_fallthru
      _
    // Predicated region
    $region14: #{tpu_custom_call.1} parent=1 // pred_check
      _
    $region15: #{tpu_custom_call.1} parent=1 // pred_check_branch
      %32 = sbr.rel (0) target = $region17
    $region16: #{tpu_custom_call.1} parent=1 // pred_region
      %s34 = ssub.s32 1024, 1024
      %35 = vsyncadd [#allocation7], %s34
      %s36 = sshll.u32 [#allocation6], 4
      %s37 = int_to_ptr.vmem [resolvable:$true] %s36
      %42 = dma.hbm_to_vmem [thread:$0]  %s3, 1024, %s37, [#allocation7], 64, 64, 4
    $region17: #{tpu_custom_call.1} parent=1 // pred_fallthru
      _
    // Predicated region
    $region18: #{tpu_custom_call.1} parent=1 // pred_check
      _
    $region19: #{tpu_custom_call.1} parent=1 // pred_check_branch
      %44 = sbr.rel (0) target = $region21
    $region20: #{tpu_custom_call.1} parent=1 // pred_region
      _
    $region21: #{tpu_custom_call.1} parent=1 // pred_fallthru
      _
    // Predicated region
    $region22: #{tpu_custom_call.1} parent=1 // pred_check
      _
    $region23: #{tpu_custom_call.1} parent=1 // pred_check_branch
      %46 = sbr.rel (0) target = $region25
    $region24: #{tpu_custom_call.1} parent=1 // pred_region
      _
    $region25: #{tpu_custom_call.1} parent=1 // pred_fallthru
      _
    // Predicated region
    $region26: #{tpu_custom_call.1} parent=1 // pred_check
      _
    $region27: #{tpu_custom_call.1} parent=1 // pred_check_branch
      %48 = sbr.rel (0) target = $region29
    $region28: #{tpu_custom_call.1} parent=1 // pred_region
      _
    $region29: #{tpu_custom_call.1} parent=1 // pred_fallthru
      _
    // Predicated region
    $region30: #{tpu_custom_call.1} parent=1 // pred_check
      _
    $region31: #{tpu_custom_call.1} parent=1 // pred_check_branch
      %50 = sbr.rel (0) target = $region33
    $region32: #{tpu_custom_call.1} parent=1 // pred_region
      %51 = dma.done [#allocation4], 512
    $region33: #{tpu_custom_call.1} parent=1 // pred_fallthru
      _
    // Predicated region
    $region34: #{tpu_custom_call.1} parent=1 // pred_check
      _
    $region35: #{tpu_custom_call.1} parent=1 // pred_check_branch
      %53 = sbr.rel (0) target = $region37
    $region36: #{tpu_custom_call.1} parent=1 // pred_region
      %54 = dma.done [#allocation7], 1024
    $region37: #{tpu_custom_call.1} parent=1 // pred_fallthru
      _
    %p56 = scmp.eq.s32.totalorder 0, 0
    // Predicated region
    $region38: #{tpu_custom_call.1} parent=1 // pred_check
      %p57 = pneg %p56
    $region39: #{tpu_custom_call.1} parent=1 // pred_check_branch
      %59 = sbr.rel (%p57) target = $region41
    $region40: #{tpu_custom_call.1} parent=1 // pred_region
      %60 = vst [vmem:[#allocation2] sm:$0xff] 0.0
      %61 = vst [vmem:[#allocation2 + $0x8] sm:$0xff] 0.0
    $region41: #{tpu_custom_call.1} parent=1 // pred_fallthru
      _
    %v62 = vld [vmem:[#allocation3] sm:$0xff]
    %v63 = vld [vmem:[#allocation3 + $0x8] sm:$0xff]
    %v64 = vld [vmem:[#allocation3 + $0x10] sm:$0xff]
    %v65 = vld [vmem:[#allocation3 + $0x18] sm:$0xff]
    %v66 = vunpack.c.l.s8.bf16 %v62
    %v67 = vunpack.c.h.s8.bf16 %v62
    %v68 = vunpack.c.l.s8.bf16 %v63
    %v69 = vunpack.c.h.s8.bf16 %v63
    %v70 = vunpack.c.l.s8.bf16 %v64
    %v71 = vunpack.c.h.s8.bf16 %v64
    %v72 = vunpack.c.l.s8.bf16 %v65
    %v73 = vunpack.c.h.s8.bf16 %v65
    %v74 = vld [vmem:[#allocation6] sm:$0xf]
    %v75 = vld [vmem:[#allocation6 + $0x4] sm:$0xf]
    %v76 = vld [vmem:[#allocation6 + $0x8] sm:$0xf]
    %v77 = vld [vmem:[#allocation6 + $0xc] sm:$0xf]
    %v78 = vld [vmem:[#allocation6 + $0x10] sm:$0xf]
    %v79 = vld [vmem:[#allocation6 + $0x14] sm:$0xf]
    %v80 = vld [vmem:[#allocation6 + $0x18] sm:$0xf]
    %v81 = vld [vmem:[#allocation6 + $0x1c] sm:$0xf]
    %v82 = vld [vmem:[#allocation6 + $0x20] sm:$0xf]
    %v83 = vld [vmem:[#allocation6 + $0x24] sm:$0xf]
    %v84 = vld [vmem:[#allocation6 + $0x28] sm:$0xf]
    %v85 = vld [vmem:[#allocation6 + $0x2c] sm:$0xf]
    %v86 = vld [vmem:[#allocation6 + $0x30] sm:$0xf]
    %v87 = vld [vmem:[#allocation6 + $0x34] sm:$0xf]
    %v88 = vld [vmem:[#allocation6 + $0x38] sm:$0xf]
    %v89 = vld [vmem:[#allocation6 + $0x3c] sm:$0xf]
    %v106 = vunpack.c.l.b16 %v74
    %v107 = vunpack.c.l.b16 %v75
    %v108 = vunpack.c.l.b16 %v76
    %v109 = vunpack.c.l.b16 %v77
    %v110 = vunpack.c.l.b16 %v78
    %v111 = vunpack.c.l.b16 %v79
    %v112 = vunpack.c.l.b16 %v80
    %v113 = vunpack.c.l.b16 %v81
    %v114 = vunpack.c.l.b16 %v82
    %v115 = vunpack.c.l.b16 %v83
    %v116 = vunpack.c.l.b16 %v84
    %v117 = vunpack.c.l.b16 %v85
    %v118 = vunpack.c.l.b16 %v86
    %v119 = vunpack.c.l.b16 %v87
    %v120 = vunpack.c.l.b16 %v88
    %v121 = vunpack.c.l.b16 %v89
    %v122 = vpack.c.b16 %v107, %v106
    %v123 = vpack.c.b16 %v109, %v108
    %v124 = vpack.c.b16 %v111, %v110
    %v125 = vpack.c.b16 %v113, %v112
    %v126 = vpack.c.b16 %v115, %v114
    %v127 = vpack.c.b16 %v117, %v116
    %v128 = vpack.c.b16 %v119, %v118
    %v129 = vpack.c.b16 %v121, %v120
    %138 = vmatprep.subr.bf16.mxu0 0
    %139 = vmatpush1.bf16.msra.mxu0 %v129
    %140 = vmatprep.subr.bf16.mxu0 0
    %141 = vmatpush1.bf16.msra.mxu0 %v128
    %142 = vmatprep.subr.bf16.mxu0 0
    %143 = vmatpush1.bf16.msra.mxu0 %v127
    %144 = vmatprep.subr.bf16.mxu0 0
    %145 = vmatpush1.bf16.msra.mxu0 %v126
    %146 = vmatprep.subr.bf16.mxu0 0
    %147 = vmatpush1.bf16.msra.mxu0 %v125
    %148 = vmatprep.subr.bf16.mxu0 0
    %149 = vmatpush1.bf16.msra.mxu0 %v124
    %150 = vmatprep.subr.bf16.mxu0 0
    %151 = vmatpush1.bf16.msra.mxu0 %v123
    %152 = vmatprep.subr.bf16.mxu0 0
    %153 = vmatpush1.bf16.msra.mxu0 %v122
    %154 = vmatprep.subr.bf16.mxu0 0
    %155 = vmatpush2.bf16.msra.mxu0 0
    %156 = vmatprep.subr.bf16.mxu0 0
    %157 = vmatpush2.bf16.msra.mxu0 0
    %158 = vmatprep.subr.bf16.mxu0 0
    %159 = vmatpush2.bf16.msra.mxu0 0
    %160 = vmatprep.subr.bf16.mxu0 0
    %161 = vmatpush2.bf16.msra.mxu0 0
    %162 = vmatprep.subr.bf16.mxu0 0
    %163 = vmatpush2.bf16.msra.mxu0 0
    %164 = vmatprep.subr.bf16.mxu0 0
    %165 = vmatpush2.bf16.msra.mxu0 0
    %166 = vmatprep.subr.bf16.mxu0 0
    %167 = vmatpush2.bf16.msra.mxu0 0
    %168 = vmatprep.subr.bf16.mxu0 0
    %169 = vmatpush2.bf16.msra.mxu0 0
    %170 = vmatprep.mubr.bf16.mxu0 0
    %171 = vmatmul.mubr.bf16.gmra.mxu0 %v66
    %v172 = vpop.f32.mrf.mxu0
    %v173 = vadd.f32 0.0, %v172
    %v174 = vpop.f32.mrf.mxu0
    %v175 = vpop.f32.mrf.mxu0
    %v176 = vadd.f32 0.0, %v175
    %v177 = vpop.f32.mrf.mxu0
    %178 = vmatprep.mubr.bf16.mxu0 0
    %179 = vmatmul.mubr.bf16.gmra.mxu0 %v67
    %v180 = vpop.f32.mrf.mxu0
    %v181 = vadd.f32 0.0, %v180
    %v182 = vpop.f32.mrf.mxu0
    %v183 = vpop.f32.mrf.mxu0
    %v184 = vadd.f32 0.0, %v183
    %v185 = vpop.f32.mrf.mxu0
    %186 = vmatprep.mubr.bf16.mxu0 0
    %187 = vmatmul.mubr.bf16.gmra.mxu0 %v68
    %v188 = vpop.f32.mrf.mxu0
    %v189 = vadd.f32 0.0, %v188
    %v190 = vpop.f32.mrf.mxu0
    %v191 = vpop.f32.mrf.mxu0
    %v192 = vadd.f32 0.0, %v191
    %v193 = vpop.f32.mrf.mxu0
    %194 = vmatprep.mubr.bf16.mxu0 0
    %195 = vmatmul.mubr.bf16.gmra.mxu0 %v69
    %v196 = vpop.f32.mrf.mxu0
    %v197 = vadd.f32 0.0, %v196
    %v198 = vpop.f32.mrf.mxu0
    %v199 = vpop.f32.mrf.mxu0
    %v200 = vadd.f32 0.0, %v199
    %v201 = vpop.f32.mrf.mxu0
    %202 = vmatprep.mubr.bf16.mxu0 0
    %203 = vmatmul.mubr.bf16.gmra.mxu0 %v70
    %v204 = vpop.f32.mrf.mxu0
    %v205 = vadd.f32 0.0, %v204
    %v206 = vpop.f32.mrf.mxu0
    %v207 = vpop.f32.mrf.mxu0
    %v208 = vadd.f32 0.0, %v207
    %v209 = vpop.f32.mrf.mxu0
    %210 = vmatprep.mubr.bf16.mxu0 0
    %211 = vmatmul.mubr.bf16.gmra.mxu0 %v71
    %v212 = vpop.f32.mrf.mxu0
    %v213 = vadd.f32 0.0, %v212
    %v214 = vpop.f32.mrf.mxu0
    %v215 = vpop.f32.mrf.mxu0
    %v216 = vadd.f32 0.0, %v215
    %v217 = vpop.f32.mrf.mxu0
    %218 = vmatprep.mubr.bf16.mxu0 0
    %219 = vmatmul.mubr.bf16.gmra.mxu0 %v72
    %v220 = vpop.f32.mrf.mxu0
    %v221 = vadd.f32 0.0, %v220
    %v222 = vpop.f32.mrf.mxu0
    %v223 = vpop.f32.mrf.mxu0
    %v224 = vadd.f32 0.0, %v223
    %v225 = vpop.f32.mrf.mxu0
    %226 = vmatprep.mubr.bf16.mxu0 0
    %227 = vmatmul.mubr.bf16.gmra.mxu0 %v73
    %v228 = vpop.f32.mrf.mxu0
    %v229 = vadd.f32 0.0, %v228
    %v230 = vpop.f32.mrf.mxu0
    %v231 = vpop.f32.mrf.mxu0
    %v232 = vadd.f32 0.0, %v231
    %v233 = vpop.f32.mrf.mxu0
    %234 = vdwg.mxu0
    %v235 = vld [vmem:[%s1] sm:$0xff]
    %v236 = vld [vmem:[%s1 + $0x8] sm:$0xff]
    %v237 = vld [vmem:[%s1 + $0x10] sm:$0xff]
    %v238 = vld [vmem:[%s1 + $0x18] sm:$0xff]
    %v239 = vld [vmem:[%s1 + $0x20] sm:$0xff]
    %v240 = vld [vmem:[%s1 + $0x28] sm:$0xff]
    %v241 = vld [vmem:[%s1 + $0x30] sm:$0xff]
    %v242 = vld [vmem:[%s1 + $0x38] sm:$0xff]
    %v243 = vld [vmem:[%s1 + $0x40] sm:$0xff]
    %v244 = vld [vmem:[%s1 + $0x48] sm:$0xff]
    %v245 = vld [vmem:[%s1 + $0x50] sm:$0xff]
    %v246 = vld [vmem:[%s1 + $0x58] sm:$0xff]
    %v247 = vld [vmem:[%s1 + $0x60] sm:$0xff]
    %v248 = vld [vmem:[%s1 + $0x68] sm:$0xff]
    %v249 = vld [vmem:[%s1 + $0x70] sm:$0xff]
    %v250 = vld [vmem:[%s1 + $0x78] sm:$0xff]
    %252 = vset.pattern.permute.xlu0 0
    %253 = vperm.xlu0 %252, %v235
    %v254 = vpop.permute.xlu0 %253
    %257 = vset.pattern.permute.xlu0 0
    %258 = vperm.xlu0 %257, %v236
    %v259 = vpop.permute.xlu0 %258
    %262 = vset.pattern.permute.xlu0 0
    %263 = vperm.xlu0 %262, %v237
    %v264 = vpop.permute.xlu0 %263
    %267 = vset.pattern.permute.xlu0 0
    %268 = vperm.xlu0 %267, %v238
    %v269 = vpop.permute.xlu0 %268
    %272 = vset.pattern.permute.xlu0 0
    %273 = vperm.xlu0 %272, %v239
    %v274 = vpop.permute.xlu0 %273
    %277 = vset.pattern.permute.xlu0 0
    %278 = vperm.xlu0 %277, %v240
    %v279 = vpop.permute.xlu0 %278
    %282 = vset.pattern.permute.xlu0 0
    %283 = vperm.xlu0 %282, %v241
    %v284 = vpop.permute.xlu0 %283
    %287 = vset.pattern.permute.xlu0 0
    %288 = vperm.xlu0 %287, %v242
    %v289 = vpop.permute.xlu0 %288
    %292 = vset.pattern.permute.xlu0 0
    %293 = vperm.xlu0 %292, %v243
    %v294 = vpop.permute.xlu0 %293
    %297 = vset.pattern.permute.xlu0 0
    %298 = vperm.xlu0 %297, %v244
    %v299 = vpop.permute.xlu0 %298
    %302 = vset.pattern.permute.xlu0 0
    %303 = vperm.xlu0 %302, %v245
    %v304 = vpop.permute.xlu0 %303
    %307 = vset.pattern.permute.xlu0 0
    %308 = vperm.xlu0 %307, %v246
    %v309 = vpop.permute.xlu0 %308
    %312 = vset.pattern.permute.xlu0 0
    %313 = vperm.xlu0 %312, %v247
    %v314 = vpop.permute.xlu0 %313
    %317 = vset.pattern.permute.xlu0 0
    %318 = vperm.xlu0 %317, %v248
    %v319 = vpop.permute.xlu0 %318
    %322 = vset.pattern.permute.xlu0 0
    %323 = vperm.xlu0 %322, %v249
    %v324 = vpop.permute.xlu0 %323
    %327 = vset.pattern.permute.xlu0 0
    %328 = vperm.xlu0 %327, %v250
    %v329 = vpop.permute.xlu0 %328
    %v331 = vmul.f32 %v173, %v254
    %v332 = vmul.f32 %v176, %v259
    %v333 = vmul.f32 %v181, %v264
    %v334 = vmul.f32 %v184, %v269
    %v335 = vmul.f32 %v189, %v274
    %v336 = vmul.f32 %v192, %v279
    %v337 = vmul.f32 %v197, %v284
    %v338 = vmul.f32 %v200, %v289
    %v339 = vmul.f32 %v205, %v294
    %v340 = vmul.f32 %v208, %v299
    %v341 = vmul.f32 %v213, %v304
    %v342 = vmul.f32 %v216, %v309
    %v343 = vmul.f32 %v221, %v314
    %v344 = vmul.f32 %v224, %v319
    %v345 = vmul.f32 %v229, %v324
    %v346 = vmul.f32 %v232, %v329
    %v347 = vld [vmem:[%s4] sm:$0x1]
    %v349 = vlaneseq
    %v350 = vshrl.u32 %v349, 7
    %v351 = vsub.s32 0, %v350
    %v352 = vrot.slane %v347, %v351
    %v354 = vadd.f32 %v331, %v352
    %v355 = vadd.f32 %v332, %v352
    %v356 = vadd.f32 %v333, %v352
    %v357 = vadd.f32 %v334, %v352
    %v358 = vadd.f32 %v335, %v352
    %v359 = vadd.f32 %v336, %v352
    %v360 = vadd.f32 %v337, %v352
    %v361 = vadd.f32 %v338, %v352
    %v362 = vadd.f32 %v339, %v352
    %v363 = vadd.f32 %v340, %v352
    %v364 = vadd.f32 %v341, %v352
    %v365 = vadd.f32 %v342, %v352
    %v366 = vadd.f32 %v343, %v352
    %v367 = vadd.f32 %v344, %v352
    %v368 = vadd.f32 %v345, %v352
    %v369 = vadd.f32 %v346, %v352
    %v370 = vmax.f32 %v354, 0.0
    %v371 = vmax.f32 %v355, 0.0
    %v372 = vmax.f32 %v356, 0.0
    %v373 = vmax.f32 %v357, 0.0
    %v374 = vmax.f32 %v358, 0.0
    %v375 = vmax.f32 %v359, 0.0
    %v376 = vmax.f32 %v360, 0.0
    %v377 = vmax.f32 %v361, 0.0
    %v378 = vmax.f32 %v362, 0.0
    %v379 = vmax.f32 %v363, 0.0
    %v380 = vmax.f32 %v364, 0.0
    %v381 = vmax.f32 %v365, 0.0
    %v382 = vmax.f32 %v366, 0.0
    %v383 = vmax.f32 %v367, 0.0
    %v384 = vmax.f32 %v368, 0.0
    %v385 = vmax.f32 %v369, 0.0
    %s386 = smul.u32 0, 128
    %v387 = vld [vmem:[#allocation2] sm:$0xff]
    %v388 = vld [vmem:[#allocation2 + $0x8] sm:$0xff]
    %s389 = sshra.s32 %s386, 7
    %s390 = sand.u32 %s386, 127
    %s391 = smul.addr %s389, 4
    %s392 = scalar_lea.vmem %s2, %s391
    %v393 = vld [vmem:[%s392] sm:$0xf]
    %v394 = vld [vmem:[%s392 + $0x4] sm:$0xf]
    %v395 = vpack.c.bf16 %v371, %v370
    %v396 = vpack.c.bf16 %v373, %v372
    %v397 = vpack.c.bf16 %v375, %v374
    %v398 = vpack.c.bf16 %v377, %v376
    %v399 = vpack.c.bf16 %v379, %v378
    %v400 = vpack.c.bf16 %v381, %v380
    %v401 = vpack.c.bf16 %v383, %v382
    %v402 = vpack.c.bf16 %v385, %v384
    %v405 = vunpack.c.l.b16 %v393
    %v406 = vunpack.c.l.b16 %v394
    %v407 = vpack.c.b16 %v406, %v405
    %409 = vmatprep.subr.bf16.mxu0 0
    %410 = vmatpush1.bf16.msra.mxu0 %v402
    %411 = vmatprep.subr.bf16.mxu0 0
    %412 = vmatpush1.bf16.msra.mxu0 %v401
    %413 = vmatprep.subr.bf16.mxu0 0
    %414 = vmatpush1.bf16.msra.mxu0 %v400
    %415 = vmatprep.subr.bf16.mxu0 0
    %416 = vmatpush1.bf16.msra.mxu0 %v399
    %417 = vmatprep.subr.bf16.mxu0 0
    %418 = vmatpush1.bf16.msra.mxu0 %v398
    %419 = vmatprep.subr.bf16.mxu0 0
    %420 = vmatpush1.bf16.msra.mxu0 %v397
    %421 = vmatprep.subr.bf16.mxu0 0
    %422 = vmatpush1.bf16.msra.mxu0 %v396
    %423 = vmatprep.subr.bf16.mxu0 0
    %424 = vmatpush1.bf16.msra.mxu0 %v395
    %425 = vmatprep.subr.bf16.mxu0 0
    %426 = vmatpush2.bf16.msra.mxu0 0
    %427 = vmatprep.subr.bf16.mxu0 0
    %428 = vmatpush2.bf16.msra.mxu0 0
    %429 = vmatprep.subr.bf16.mxu0 0
    %430 = vmatpush2.bf16.msra.mxu0 0
    %431 = vmatprep.subr.bf16.mxu0 0
    %432 = vmatpush2.bf16.msra.mxu0 0
    %433 = vmatprep.subr.bf16.mxu0 0
    %434 = vmatpush2.bf16.msra.mxu0 0
    %435 = vmatprep.subr.bf16.mxu0 0
    %436 = vmatpush2.bf16.msra.mxu0 0
    %437 = vmatprep.subr.bf16.mxu0 0
    %438 = vmatpush2.bf16.msra.mxu0 0
    %439 = vmatprep.subr.bf16.mxu0 0
    %440 = vmatpush2.bf16.msra.mxu0 0
    %441 = vmatprep.mubr.bf16.mxu0 0
    %442 = vmatmul.mubr.bf16.gmra.mxu0 %v407
    %v443 = vpop.f32.mrf.mxu0
    %v444 = vadd.f32 0.0, %v443
    %v445 = vpop.f32.mrf.mxu0
    %v446 = vpop.f32.mrf.mxu0
    %v447 = vadd.f32 0.0, %v446
    %v448 = vpop.f32.mrf.mxu0
    %449 = vdwg.mxu0
    %v450 = vadd.f32 %v387, %v444
    %v451 = vadd.f32 %v388, %v447
    %452 = vst [vmem:[#allocation2] sm:$0xff] %v450
    %453 = vst [vmem:[#allocation2 + $0x8] sm:$0xff] %v451
    // Predicated region
    $region42: #{tpu_custom_call.1} parent=1 // pred_check
      %p454 = pneg %p56
    $region43: #{tpu_custom_call.1} parent=1 // pred_check_branch
      %456 = sbr.rel (%p454) target = $region45
    $region44: #{tpu_custom_call.1} parent=1 // pred_region
      %v457 = vld [vmem:[#allocation2] sm:$0xff]
      %v458 = vld [vmem:[#allocation2 + $0x8] sm:$0xff]
      %v459 = vld [vmem:[%s5] sm:$0xff]
      %v460 = vld [vmem:[%s5 + $0x8] sm:$0xff]
      %v461 = vld [vmem:[%s5 + $0x10] sm:$0xff]
      %v462 = vld [vmem:[%s5 + $0x18] sm:$0xff]
      %v463 = vld [vmem:[%s5 + $0x20] sm:$0xff]
      %v464 = vld [vmem:[%s5 + $0x28] sm:$0xff]
      %v465 = vld [vmem:[%s5 + $0x30] sm:$0xff]
      %v466 = vld [vmem:[%s5 + $0x38] sm:$0xff]
      %v467 = vld [vmem:[%s5 + $0x40] sm:$0xff]
      %v468 = vld [vmem:[%s5 + $0x48] sm:$0xff]
      %v469 = vld [vmem:[%s5 + $0x50] sm:$0xff]
      %v470 = vld [vmem:[%s5 + $0x58] sm:$0xff]
      %v471 = vld [vmem:[%s5 + $0x60] sm:$0xff]
      %v472 = vld [vmem:[%s5 + $0x68] sm:$0xff]
      %v473 = vld [vmem:[%s5 + $0x70] sm:$0xff]
      %v474 = vld [vmem:[%s5 + $0x78] sm:$0xff]
      %v475 = vld [vmem:[%s6] sm:$0x1]
      %v477 = vlaneseq
      %v478 = vshrl.u32 %v477, 7
      %v479 = vsub.s32 0, %v478
      %v480 = vrot.slane %v475, %v479
      %482 = vmatprep.subr.mxu0 0.0
      %483 = vmatpush1.msra.mxu0 %v474
      %484 = vmatprep.subr.mxu0 0.0
      %485 = vmatpush1.msra.mxu0 %v473
      %486 = vmatprep.subr.mxu0 0.0
      %487 = vmatpush1.msra.mxu0 %v472
      %488 = vmatprep.subr.mxu0 0.0
      %489 = vmatpush1.msra.mxu0 %v471
      %490 = vmatprep.subr.mxu0 0.0
      %491 = vmatpush1.msra.mxu0 %v470
      %492 = vmatprep.subr.mxu0 0.0
      %493 = vmatpush1.msra.mxu0 %v469
      %494 = vmatprep.subr.mxu0 0.0
      %495 = vmatpush1.msra.mxu0 %v468
      %496 = vmatprep.subr.mxu0 0.0
      %497 = vmatpush1.msra.mxu0 %v467
      %498 = vmatprep.subr.mxu0 0.0
      %499 = vmatpush1.msra.mxu0 %v466
      %500 = vmatprep.subr.mxu0 0.0
      %501 = vmatpush1.msra.mxu0 %v465
      %502 = vmatprep.subr.mxu0 0.0
      %503 = vmatpush1.msra.mxu0 %v464
      %504 = vmatprep.subr.mxu0 0.0
      %505 = vmatpush1.msra.mxu0 %v463
      %506 = vmatprep.subr.mxu0 0.0
      %507 = vmatpush1.msra.mxu0 %v462
      %508 = vmatprep.subr.mxu0 0.0
      %509 = vmatpush1.msra.mxu0 %v461
      %510 = vmatprep.subr.mxu0 0.0
      %511 = vmatpush1.msra.mxu0 %v460
      %512 = vmatprep.subr.mxu0 0.0
      %513 = vmatpush1.msra.mxu0 %v459
      %514 = vmatprep.subr.mxu0 0.0
      %515 = vmatpush2.msra.mxu0 0.0
      %516 = vmatprep.subr.mxu0 0.0
      %517 = vmatpush2.msra.mxu0 0.0
      %518 = vmatprep.subr.mxu0 0.0
      %519 = vmatpush2.msra.mxu0 0.0
      %520 = vmatprep.subr.mxu0 0.0
      %521 = vmatpush2.msra.mxu0 0.0
      %522 = vmatprep.subr.mxu0 0.0
      %523 = vmatpush2.msra.mxu0 0.0
      %524 = vmatprep.subr.mxu0 0.0
      %525 = vmatpush2.msra.mxu0 0.0
      %526 = vmatprep.subr.mxu0 0.0
      %527 = vmatpush2.msra.mxu0 0.0
      %528 = vmatprep.subr.mxu0 0.0
      %529 = vmatpush2.msra.mxu0 0.0
      %530 = vmatprep.subr.mxu0 0.0
      %531 = vmatpush2.msra.mxu0 0.0
      %532 = vmatprep.subr.mxu0 0.0
      %533 = vmatpush2.msra.mxu0 0.0
      %534 = vmatprep.subr.mxu0 0.0
      %535 = vmatpush2.msra.mxu0 0.0
      %536 = vmatprep.subr.mxu0 0.0
      %537 = vmatpush2.msra.mxu0 0.0
      %538 = vmatprep.subr.mxu0 0.0
      %539 = vmatpush2.msra.mxu0 0.0
      %540 = vmatprep.subr.mxu0 0.0
      %541 = vmatpush2.msra.mxu0 0.0
      %542 = vmatprep.subr.mxu0 0.0
      %543 = vmatpush2.msra.mxu0 0.0
      %544 = vmatprep.subr.mxu0 0.0
      %545 = vmatpush2.msra.mxu0 0.0
      %546 = vmatprep.mubr.f32.mxu0 0.0
      %547 = vmatmul.mubr.f32.gmra.mxu0 %v457
      %v548 = vpop.f32.mrf.mxu0
      %v549 = vadd.f32 %v480, %v548
      %v550 = vpop.f32.mrf.mxu0
      %551 = vmatprep.mubr.f32.mxu0 0.0
      %552 = vmatmul.mubr.f32.gmra.mxu0 %v458
      %v553 = vpop.f32.mrf.mxu0
      %v554 = vadd.f32 %v480, %v553
      %v555 = vpop.f32.mrf.mxu0
      %556 = vdwg.mxu0
      %v557 = vlaneseq
      %v558 = vand.u32 %v557, 127
      %vm559 = vcmp.lt.s32.totalorder %v558, 8
      %v560 = vsel %vm559, %v549, -1e+30
      %v561 = vsel %vm559, %v554, -1e+30
      %562 = vmax.xlane.f32.xlu0 %v560
      %v563 = vpop.xlane.xlu0 %562
      %564 = vmax.xlane.f32.xlu0 %v561
      %v565 = vpop.xlane.xlu0 %564
      %v566 = vsub.f32 %v560, %v563
      %v567 = vsub.f32 %v561, %v565
      %v568 = vmul.f32 %v566, 1.442695
      %v569 = vpow.pop %v568
      %v570 = vmul.f32 %v567, 1.442695
      %v571 = vpow.pop %v570
      %572 = vadd.xlane.f32.xlu0 %v569
      %v573 = vpop.xlane.xlu0 %572
      %574 = vadd.xlane.f32.xlu0 %v571
      %v575 = vpop.xlane.xlu0 %574
      %v576 = vlog2.pop %v573
      %v577 = vmul.f32 %v576, 0.6931472
      %v578 = vlog2.pop %v575
      %v579 = vmul.f32 %v578, 0.6931472
      %v580 = vsub.f32 %v566, %v577
      %v581 = vsub.f32 %v567, %v579
      %582 = vst [vmem:[#allocation8] sm:$0xff] %v580
      %583 = vst [vmem:[#allocation8 + $0x8] sm:$0xff] %v581
    $region45: #{tpu_custom_call.1} parent=1 // pred_fallthru
      _
    // Predicated region
    $region46: #{tpu_custom_call.1} parent=1 // pred_check
      _
    $region47: #{tpu_custom_call.1} parent=1 // pred_check_branch
      %585 = sbr.rel (0) target = $region49
    $region48: #{tpu_custom_call.1} parent=1 // pred_region
      %s587 = ssub.s32 256, 256
      %588 = vsyncadd [#allocation5], %s587
      %s589 = sshll.u32 [#allocation8], 4
      %s590 = int_to_ptr.vmem [resolvable:$true] %s589
      %595 = dma.vmem_to_hbm [thread:$0]  %s590, 256, %s7, [#allocation5], 128, 128, 8
    $region49: #{tpu_custom_call.1} parent=1 // pred_fallthru
      _
    // Predicated region
    $region50: #{tpu_custom_call.1} parent=1 // pred_check
      _
    $region51: #{tpu_custom_call.1} parent=1 // pred_check_branch
      %597 = sbr.rel (0) target = $region53
    $region52: #{tpu_custom_call.1} parent=1 // pred_region
      %598 = dma.done [#allocation5], 256
    $region53: #{tpu_custom_call.1} parent=1 // pred_fallthru
      _
    %599 = vsyncpa [#allocation4], 1
    %600 = vsyncpa [#allocation7], 1
    %601 = vsyncpa [#allocation5], 1

</llo_original>
